<compile_context>
chip_gen: v5e
topology: v5e:2x2
jax: 0.10.0
libtpu: 0.0.40
codegen_flags: <defaults>
</compile_context>

<pallas_src>
import jax
import jax.numpy as jnp
from jax.experimental import pallas as pl
from jax.experimental.pallas import tpu as pltpu


def mlp_kernel(x_ref, w1_ref, b1_ref, w2_ref, b2_ref, w3_ref, b3_ref, o_ref):
    # x arrives as f32; cast to bf16 here (free under MXU) instead of a
    # standalone XLA cast op in the wrapper.
    x = x_ref[...].astype(jnp.bfloat16)
    # fc1 + relu (bf16 MXU inputs, f32 accumulate, f32 bias/ReLU epilogue)
    h1 = jnp.dot(x, w1_ref[...], preferred_element_type=jnp.float32)
    h1 = jnp.maximum(h1 + b1_ref[...], 0.0)
    # fc2 + relu (hidden padded to 256 -> one clean 256x256 MXU tile)
    h2 = jnp.dot(h1.astype(jnp.bfloat16), w2_ref[...],
                 preferred_element_type=jnp.float32)
    h2 = jnp.maximum(h2 + b2_ref[...], 0.0)
    # fc3 (no activation), output lanes padded to 128 -> unmasked vst
    out = jnp.dot(h2.astype(jnp.bfloat16), w3_ref[...],
                  preferred_element_type=jnp.float32)
    o_ref[...] = (out + b3_ref[...]).astype(o_ref.dtype)


def prepare_params(params, *, hidden_pad=256, out_pad=128):
    """One-time prep (hoisted out of the forward path):
    - transpose PyTorch (out, in) weights to (in, out),
    - zero-pad the hidden dim 200 -> hidden_pad (ReLU keeps padded lanes at 0),
    - zero-pad fc3's output dim 10 -> out_pad for lane-dense stores,
    - cast weights to bf16 (MXU inputs), keep biases in f32 (VPU epilogue)."""
    w1, b1 = params["w1"], params["b1"]   # (200, 784), (200,)
    w2, b2 = params["w2"], params["b2"]   # (200, 200), (200,)
    w3, b3 = params["w3"], params["b3"]   # (10, 200),  (10,)
    dim_in = w1.shape[1]
    dim_hidden = w1.shape[0]
    dim_out = w3.shape[0]
    assert hidden_pad % 128 == 0 and hidden_pad >= dim_hidden
    assert out_pad % 128 == 0 and out_pad >= dim_out

    w1_t = jnp.zeros((dim_in, hidden_pad), jnp.float32)
    w1_t = w1_t.at[:, :dim_hidden].set(w1.T)
    b1_p = jnp.zeros((1, hidden_pad), jnp.float32).at[:, :dim_hidden].set(b1)

    w2_t = jnp.zeros((hidden_pad, hidden_pad), jnp.float32)
    w2_t = w2_t.at[:dim_hidden, :dim_hidden].set(w2.T)
    b2_p = jnp.zeros((1, hidden_pad), jnp.float32).at[:, :dim_hidden].set(b2)

    w3_t = jnp.zeros((hidden_pad, out_pad), jnp.float32)
    w3_t = w3_t.at[:dim_hidden, :dim_out].set(w3.T)
    b3_p = jnp.zeros((1, out_pad), jnp.float32).at[:, :dim_out].set(b3)

    return dict(
        w1_t=w1_t.astype(jnp.bfloat16),
        w2_t=w2_t.astype(jnp.bfloat16),
        w3_t=w3_t.astype(jnp.bfloat16),
        b1=b1_p, b2=b2_p, b3=b3_p,
        dim_in=dim_in, dim_hidden=dim_hidden, hidden_pad=hidden_pad,
        dim_out=dim_out, out_pad=out_pad,
    )


def mnist_mlp_forward(x_nchw, prepared, *, bm=None):
    """x_nchw: (B, C, H, W) float32. Returns (B, dim_out) f32 logits."""
    B = x_nchw.shape[0]
    # Flatten exactly like the module: view(-1, shape[1]*shape[-2]*shape[-1]).
    dim_in = x_nchw.shape[1] * x_nchw.shape[-2] * x_nchw.shape[-1]
    assert dim_in == prepared["dim_in"], (dim_in, prepared["dim_in"])
    # reshape is metadata-only; no wrapper-side cast or pad (both folded away).
    x2d = x_nchw.reshape(-1, dim_in)

    hidden_pad = prepared["hidden_pad"]
    out_pad = prepared["out_pad"]
    dim_out = prepared["dim_out"]

    if bm is None:
        # Single grid step for small batches: one TC, no per-step (~0.35us)
        # overhead, no duplicated weight DMA.  Cap at 512 rows so VMEM stays
        # bounded (double-buffered x tile ~3.2 MB at bm=512) and larger batches
        # expose >= 2 parallel steps for v7x's two TensorCores.
        bm = B if B <= 512 else 512

    grid_steps = pl.cdiv(B, bm)

    # Grid-invariant operands (constant index_map): single-buffer them when the
    # grid actually iterates; with a single step the annotation buys nothing,
    # so it is omitted to keep the hot demo path identical to the proven one.
    wkw = dict(pipeline_mode=pl.Buffered(1)) if grid_steps > 1 else {}

    out = pl.pallas_call(
        mlp_kernel,
        out_shape=jax.ShapeDtypeStruct((B, out_pad), jnp.float32),
        grid_spec=pltpu.PrefetchScalarGridSpec(
            num_scalar_prefetch=0,
            grid=(grid_steps,),
            in_specs=[
                # x tile (f32; partial last block handled by Pallas edge logic)
                pl.BlockSpec((bm, dim_in), lambda i: (i, 0)),
                pl.BlockSpec((dim_in, hidden_pad), lambda i: (0, 0), **wkw),    # w1^T bf16
                pl.BlockSpec((1, hidden_pad), lambda i: (0, 0), **wkw),         # b1 f32
                pl.BlockSpec((hidden_pad, hidden_pad), lambda i: (0, 0), **wkw),  # w2^T bf16
                pl.BlockSpec((1, hidden_pad), lambda i: (0, 0), **wkw),         # b2 f32
                pl.BlockSpec((hidden_pad, out_pad), lambda i: (0, 0), **wkw),   # w3^T bf16
                pl.BlockSpec((1, out_pad), lambda i: (0, 0), **wkw),            # b3 f32
            ],
            out_specs=pl.BlockSpec((bm, out_pad), lambda i: (i, 0)),
        ),
        compiler_params=pltpu.CompilerParams(
            dimension_semantics=("parallel",),
        ),
    )(x2d, prepared["w1_t"], prepared["b1"], prepared["w2_t"], prepared["b2"],
      prepared["w3_t"], prepared["b3"])

    # Strip the lane padding of the output dim (rows are already exact).
    return out[:, :dim_out]


def init_params(key):
    """Deterministic synthetic params with PyTorch nn.Linear shapes (out, in)."""
    ks = jax.random.split(key, 6)

    def lin(kw, kb, fan_in, fan_out):
        bound = 1.0 / jnp.sqrt(fan_in)
        w = jax.random.uniform(kw, (fan_out, fan_in), jnp.float32, -bound, bound)
        b = jax.random.uniform(kb, (fan_out,), jnp.float32, -bound, bound)
        return w, b

    w1, b1 = lin(ks[0], ks[1], 784, 200)   # fc1: Linear(784, 200)
    w2, b2 = lin(ks[2], ks[3], 200, 200)   # fc2: Linear(200, 200)
    w3, b3 = lin(ks[4], ks[5], 200, 10)    # fc3: Linear(200, 10)
    return dict(w1=w1, b1=b1, w2=w2, b2=b2, w3=w3, b3=b3)


def reference_forward(x_nchw, params):
    dim_in = x_nchw.shape[1] * x_nchw.shape[-2] * x_nchw.shape[-1]
    x = x_nchw.reshape(-1, dim_in)
    x = jnp.maximum(x @ params["w1"].T + params["b1"], 0.0)
    x = jnp.maximum(x @ params["w2"].T + params["b2"], 0.0)
    return x @ params["w3"].T + params["b3"]


if __name__ == "__main__":
    # MNIST shapes: (B, 1, 28, 28) -> 784 -> 256(pad of 200) -> 256 -> 128(pad of 10).
    # B=200 -> single grid step (bm=200), one TensorCore does everything.
    B, C, H, W = 200, 1, 28, 28

    key = jax.random.PRNGKey(0)
    kx, kp = jax.random.split(key)
    x = jax.random.normal(kx, (B, C, H, W), jnp.float32)
    params = init_params(kp)

    # One-time parameter prep (transposes / padding / bf16 casts hoisted here).
    prepared = prepare_params(params)

    out = mnist_mlp_forward(x, prepared)
    out = jax.block_until_ready(out)

    ref = reference_forward(x, params)
    assert out.shape == (B, 10), out.shape
    # bf16 MXU inputs with f32 accumulation -> loosened tolerance vs f32 ref.
    # (Note: x is quantized to bf16 inside the kernel, a deliberate deviation
    #  from the f32 PyTorch forward covered by this tolerance.)
    assert jnp.allclose(out, ref, atol=5e-2, rtol=5e-2), (
        "mismatch vs JAX reference; max abs diff "
        f"{float(jnp.max(jnp.abs(out - ref)))}"
    )

    print("KERNEL_OK")
</pallas_src>

<mosaic_0001>
module attributes {stable_mosaic.version = 11 : i64} {
  func.func @mlp_kernel(%arg0: i32, %arg1: memref<200x784xf32, #tpu.memory_space<vmem>>, %arg2: memref<784x256xbf16, #tpu.memory_space<vmem>>, %arg3: memref<1x256xf32, #tpu.memory_space<vmem>>, %arg4: memref<256x256xbf16, #tpu.memory_space<vmem>>, %arg5: memref<1x256xf32, #tpu.memory_space<vmem>>, %arg6: memref<256x128xbf16, #tpu.memory_space<vmem>>, %arg7: memref<1x128xf32, #tpu.memory_space<vmem>>, %arg8: memref<200x128xf32, #tpu.memory_space<vmem>>) attributes {dimension_semantics = [#tpu.dimension_semantics<parallel>], iteration_bounds = array<i64: 1>, scalar_prefetch = 0 : i64, scratch_operands = 0 : i64, tpu.core_type = #tpu.core_type<tc>, window_params = [{transform_indices = @transform_0, window_bounds = array<i64: 200, 784>}, {pipeline_mode = #tpu.pipeline_mode<synchronous>, transform_indices = @transform_1, window_bounds = array<i64: 784, 256>}, {pipeline_mode = #tpu.pipeline_mode<synchronous>, transform_indices = @transform_2, window_bounds = array<i64: 1, 256>}, {pipeline_mode = #tpu.pipeline_mode<synchronous>, transform_indices = @transform_3, window_bounds = array<i64: 256, 256>}, {pipeline_mode = #tpu.pipeline_mode<synchronous>, transform_indices = @transform_4, window_bounds = array<i64: 1, 256>}, {pipeline_mode = #tpu.pipeline_mode<synchronous>, transform_indices = @transform_5, window_bounds = array<i64: 256, 128>}, {pipeline_mode = #tpu.pipeline_mode<synchronous>, transform_indices = @transform_6, window_bounds = array<i64: 1, 128>}, {transform_indices = @transform_7, window_bounds = array<i64: 200, 128>}]} {
    %c0 = arith.constant 0 : index
    %c0_0 = arith.constant 0 : index
    %0 = vector.load %arg1[%c0, %c0_0] : memref<200x784xf32, #tpu.memory_space<vmem>>, vector<200x784xf32>
    %1 = arith.truncf %0 : vector<200x784xf32> to vector<200x784xbf16>
    %c0_1 = arith.constant 0 : index
    %c0_2 = arith.constant 0 : index
    %2 = vector.load %arg2[%c0_1, %c0_2] : memref<784x256xbf16, #tpu.memory_space<vmem>>, vector<784x256xbf16>
    %cst = arith.constant dense<0.000000e+00> : vector<200x256xf32>
    %3 = tpu.matmul %1, %2, %cst {dimension_numbers = #tpu.dot_dimension_numbers<[1], [0], [0], [1], [0, 0, 1, 1], [], []>} : vector<200x784xbf16>, vector<784x256xbf16>, vector<200x256xf32> -> vector<200x256xf32>
    %c0_3 = arith.constant 0 : index
    %c0_4 = arith.constant 0 : index
    %4 = vector.load %arg3[%c0_3, %c0_4] : memref<1x256xf32, #tpu.memory_space<vmem>>, vector<1x256xf32>
    %5 = vector.broadcast %4 : vector<1x256xf32> to vector<200x256xf32>
    %6 = arith.addf %3, %5 : vector<200x256xf32>
    %cst_5 = arith.constant 0.000000e+00 : f32
    %7 = vector.broadcast %cst_5 : f32 to vector<200x256xf32>
    %8 = arith.maximumf %6, %7 : vector<200x256xf32>
    %9 = arith.truncf %8 : vector<200x256xf32> to vector<200x256xbf16>
    %c0_6 = arith.constant 0 : index
    %c0_7 = arith.constant 0 : index
    %10 = vector.load %arg4[%c0_6, %c0_7] : memref<256x256xbf16, #tpu.memory_space<vmem>>, vector<256x256xbf16>
    %cst_8 = arith.constant dense<0.000000e+00> : vector<200x256xf32>
    %11 = tpu.matmul %9, %10, %cst_8 {dimension_numbers = #tpu.dot_dimension_numbers<[1], [0], [0], [1], [0, 0, 1, 1], [], []>} : vector<200x256xbf16>, vector<256x256xbf16>, vector<200x256xf32> -> vector<200x256xf32>
    %c0_9 = arith.constant 0 : index
    %c0_10 = arith.constant 0 : index
    %12 = vector.load %arg5[%c0_9, %c0_10] : memref<1x256xf32, #tpu.memory_space<vmem>>, vector<1x256xf32>
    %13 = vector.broadcast %12 : vector<1x256xf32> to vector<200x256xf32>
    %14 = arith.addf %11, %13 : vector<200x256xf32>
    %cst_11 = arith.constant 0.000000e+00 : f32
    %15 = vector.broadcast %cst_11 : f32 to vector<200x256xf32>
    %16 = arith.maximumf %14, %15 : vector<200x256xf32>
    %17 = arith.truncf %16 : vector<200x256xf32> to vector<200x256xbf16>
    %c0_12 = arith.constant 0 : index
    %c0_13 = arith.constant 0 : index
    %18 = vector.load %arg6[%c0_12, %c0_13] : memref<256x128xbf16, #tpu.memory_space<vmem>>, vector<256x128xbf16>
    %cst_14 = arith.constant dense<0.000000e+00> : vector<200x128xf32>
    %19 = tpu.matmul %17, %18, %cst_14 {dimension_numbers = #tpu.dot_dimension_numbers<[1], [0], [0], [1], [0, 0, 1, 1], [], []>} : vector<200x256xbf16>, vector<256x128xbf16>, vector<200x128xf32> -> vector<200x128xf32>
    %c0_15 = arith.constant 0 : index
    %c0_16 = arith.constant 0 : index
    %20 = vector.load %arg7[%c0_15, %c0_16] : memref<1x128xf32, #tpu.memory_space<vmem>>, vector<1x128xf32>
    %21 = vector.broadcast %20 : vector<1x128xf32> to vector<200x128xf32>
    %22 = arith.addf %19, %21 : vector<200x128xf32>
    %c0_17 = arith.constant 0 : index
    %c0_18 = arith.constant 0 : index
    %23 = vector.load %arg8[%c0_17, %c0_18] : memref<200x128xf32, #tpu.memory_space<vmem>>, vector<200x128xf32>
    tpu.vector_store %arg8[%c0_17, %c0_18], %22 {strides = array<i32>} : memref<200x128xf32, #tpu.memory_space<vmem>>, vector<200x128xf32>,
    return
  }
  func.func @transform_0(%arg0: i32) -> (i32, i32) {
    %c0_i32 = arith.constant 0 : i32
    %c0_i32_0 = arith.constant 0 : i32
    return %arg0, %c0_i32 : i32, i32
  }
  func.func @transform_1(%arg0: i32) -> (i32, i32) {
    %c0_i32 = arith.constant 0 : i32
    %c0_i32_0 = arith.constant 0 : i32
    %c0_i32_1 = arith.constant 0 : i32
    return %c0_i32, %c0_i32_0 : i32, i32
  }
  func.func @transform_2(%arg0: i32) -> (i32, i32) {
    %c0_i32 = arith.constant 0 : i32
    %c0_i32_0 = arith.constant 0 : i32
    %c0_i32_1 = arith.constant 0 : i32
    return %c0_i32, %c0_i32_0 : i32, i32
  }
  func.func @transform_3(%arg0: i32) -> (i32, i32) {
    %c0_i32 = arith.constant 0 : i32
    %c0_i32_0 = arith.constant 0 : i32
    %c0_i32_1 = arith.constant 0 : i32
    return %c0_i32, %c0_i32_0 : i32, i32
  }
  func.func @transform_4(%arg0: i32) -> (i32, i32) {
    %c0_i32 = arith.constant 0 : i32
    %c0_i32_0 = arith.constant 0 : i32
    %c0_i32_1 = arith.constant 0 : i32
    return %c0_i32, %c0_i32_0 : i32, i32
  }
  func.func @transform_5(%arg0: i32) -> (i32, i32) {
    %c0_i32 = arith.constant 0 : i32
    %c0_i32_0 = arith.constant 0 : i32
    %c0_i32_1 = arith.constant 0 : i32
    return %c0_i32, %c0_i32_0 : i32, i32
  }
  func.func @transform_6(%arg0: i32) -> (i32, i32) {
    %c0_i32 = arith.constant 0 : i32
    %c0_i32_0 = arith.constant 0 : i32
    %c0_i32_1 = arith.constant 0 : i32
    return %c0_i32, %c0_i32_0 : i32, i32
  }
  func.func @transform_7(%arg0: i32) -> (i32, i32) {
    %c0_i32 = arith.constant 0 : i32
    %c0_i32_0 = arith.constant 0 : i32
    return %arg0, %c0_i32 : i32, i32
  }
}

</mosaic_0001>

<llo_original>
// kernel: tpu_custom_call.1
$region0: #{tpu_custom_call.1}
  #allocation0 [shape = 'u32[]', space=smem, size = 0x4, offset = 0x4, fixed_abs, tag = 'smem constant byte address 0x4 - core index']
  #allocation1 [shape = 'u32[72,128]{1,0:T(1,128)}', space=vmem, size = 0x9000, scoped, tag = 'internal scratch']
  %s0 = inlined_call_operand.hbm [shape: f32[200,784], index: 0, kind: input, shape index: {}]
  %s1 = inlined_call_operand.hbm [shape: bf16[784,256], index: 1, kind: input, shape index: {}]
  %s2 = inlined_call_operand.hbm [shape: f32[1,256], index: 2, kind: input, shape index: {}]
  %s3 = inlined_call_operand.hbm [shape: bf16[256,256], index: 3, kind: input, shape index: {}]
  %s4 = inlined_call_operand.vmem [shape: f32[1,256], index: 4, kind: input, shape index: {}]
  %s5 = inlined_call_operand.hbm [shape: bf16[256,128], index: 5, kind: input, shape index: {}]
  %s6 = inlined_call_operand.vmem [shape: f32[1,128], index: 6, kind: input, shape index: {}]
  %s7 = inlined_call_operand.hbm [shape: f32[200,128], index: 7, kind: output, shape index: {}]
  %s8 = sld [smem:[#allocation0]]
  $region58: #{tpu_custom_call.1} parent=0
    _
  %s10 = ssub.s32 1, %s8
  %s11 = scalar_select 0, %s10, %s8
  $region1: #{tpu_custom_call.1} parent=0
    #allocation2 [shape = 'u8[716800]{0}', space=vmem, size = 0xaf000, scoped, tag = 'input window, operand 0, single buffered']
    #allocation3 [shape = 's32[1]{0}', space=sflag, size = 0x4, scoped, tag = 'scoped memory for tpu_custom_call.1']
    #allocation4 [shape = 's32[1]{0}', space=sflag, size = 0x4, scoped, tag = 'scoped memory for tpu_custom_call.1']
    #allocation5 [shape = 'u8[401408]{0}', space=vmem, size = 0x62000, scoped, tag = 'input window, operand 1, single buffered']
    #allocation6 [shape = 's32[1]{0}', space=sflag, size = 0x4, scoped, tag = 'scoped memory for tpu_custom_call.1']
    #allocation7 [shape = 'u8[1024]{0}', space=vmem, size = 0x400, scoped, tag = 'input window, operand 2, single buffered']
    #allocation8 [shape = 'u8[131072]{0}', space=vmem, size = 0x20000, scoped, tag = 'input window, operand 3, single buffered']
    #allocation9 [shape = 's32[1]{0}', space=sflag, size = 0x4, scoped, tag = 'scoped memory for tpu_custom_call.1']
    #allocation10 [shape = 'u8[65536]{0}', space=vmem, size = 0x10000, scoped, tag = 'input window, operand 5, single buffered']
    #allocation11 [shape = 'u8[102400]{0}', space=vmem, size = 0x19000, scoped, tag = 'output window, operand 0, single buffered']
    %12 = vsyncpa [#allocation3], 0
    %13 = vsyncpa [#allocation6], 0
    %14 = vsyncpa [#allocation9], 0
    %15 = vsyncpa [#allocation4], 0
    // Predicated region
    $region2: #{tpu_custom_call.1} parent=1 // pred_check
      _
    $region3: #{tpu_custom_call.1} parent=1 // pred_check_branch
      %17 = sbr.rel (0) target = $region5
    $region4: #{tpu_custom_call.1} parent=1 // pred_region
      %19 = vsyncadd [#allocation3], 0
      %s20 = sshll.u32 %s0, 4
      %s21 = int_to_ptr.hbm [resolvable:$true] %s20
      %s22 = sshll.u32 [#allocation2], 4
      %s23 = int_to_ptr.vmem [resolvable:$true] %s22
      %28 = dma.hbm_to_vmem [thread:$0]  %s21, 22400, %s23, [#allocation3], 896, 896, 56
    $region5: #{tpu_custom_call.1} parent=1 // pred_fallthru
      _
    // Predicated region
    $region6: #{tpu_custom_call.1} parent=1 // pred_check
      _
    $region7: #{tpu_custom_call.1} parent=1 // pred_check_branch
      %30 = sbr.rel (0) target = $region9
    $region8: #{tpu_custom_call.1} parent=1 // pred_region
      %32 = vsyncadd [#allocation6], 0
      %s33 = sshll.u32 %s1, 4
      %s34 = int_to_ptr.hbm [resolvable:$true] %s33
      %s35 = sshll.u32 [#allocation5], 4
      %s36 = int_to_ptr.vmem [resolvable:$true] %s35
      %41 = dma.hbm_to_vmem [thread:$0]  %s34, 12544, %s36, [#allocation6], 128, 128, 8
    $region9: #{tpu_custom_call.1} parent=1 // pred_fallthru
      _
    // Predicated region
    $region10: #{tpu_custom_call.1} parent=1 // pred_check
      _
    $region11: #{tpu_custom_call.1} parent=1 // pred_check_branch
      %43 = sbr.rel (0) target = $region13
    $region12: #{tpu_custom_call.1} parent=1 // pred_region
      %45 = vsyncadd [#allocation6], 0
      %s47 = sshll.u32 %s2, 4
      %s48 = int_to_ptr.hbm [resolvable:$true] %s47
      %s49 = sshll.u32 [#allocation7], 4
      %s50 = int_to_ptr.vmem [resolvable:$true] %s49
      %52 = dma.hbm_to_vmem [thread:$0]  %s48, 32, %s50, [#allocation6]
    $region13: #{tpu_custom_call.1} parent=1 // pred_fallthru
      _
    // Predicated region
    $region14: #{tpu_custom_call.1} parent=1 // pred_check
      _
    $region15: #{tpu_custom_call.1} parent=1 // pred_check_branch
      %54 = sbr.rel (0) target = $region17
    $region16: #{tpu_custom_call.1} parent=1 // pred_region
      %56 = vsyncadd [#allocation9], 0
      %s57 = sshll.u32 %s3, 4
      %s58 = int_to_ptr.hbm [resolvable:$true] %s57
      %s59 = sshll.u32 [#allocation8], 4
      %s60 = int_to_ptr.vmem [resolvable:$true] %s59
      %65 = dma.hbm_to_vmem [thread:$0]  %s58, 4096, %s60, [#allocation9], 128, 128, 8
    $region17: #{tpu_custom_call.1} parent=1 // pred_fallthru
      _
    // Predicated region
    $region18: #{tpu_custom_call.1} parent=1 // pred_check
      _
    $region19: #{tpu_custom_call.1} parent=1 // pred_check_branch
      %67 = sbr.rel (0) target = $region21
    $region20: #{tpu_custom_call.1} parent=1 // pred_region
      _
    $region21: #{tpu_custom_call.1} parent=1 // pred_fallthru
      _
    // Predicated region
    $region22: #{tpu_custom_call.1} parent=1 // pred_check
      _
    $region23: #{tpu_custom_call.1} parent=1 // pred_check_branch
      %69 = sbr.rel (0) target = $region25
    $region24: #{tpu_custom_call.1} parent=1 // pred_region
      %71 = vsyncadd [#allocation9], 0
      %s72 = sshll.u32 %s5, 4
      %s73 = int_to_ptr.hbm [resolvable:$true] %s72
      %s74 = sshll.u32 [#allocation10], 4
      %s75 = int_to_ptr.vmem [resolvable:$true] %s74
      %80 = dma.hbm_to_vmem [thread:$0]  %s73, 2048, %s75, [#allocation9], 64, 64, 4
    $region25: #{tpu_custom_call.1} parent=1 // pred_fallthru
      _
    // Predicated region
    $region26: #{tpu_custom_call.1} parent=1 // pred_check
      _
    $region27: #{tpu_custom_call.1} parent=1 // pred_check_branch
      %82 = sbr.rel (0) target = $region29
    $region28: #{tpu_custom_call.1} parent=1 // pred_region
      _
    $region29: #{tpu_custom_call.1} parent=1 // pred_fallthru
      _
    // Predicated region
    $region30: #{tpu_custom_call.1} parent=1 // pred_check
      _
    $region31: #{tpu_custom_call.1} parent=1 // pred_check_branch
      %84 = sbr.rel (0) target = $region33
    $region32: #{tpu_custom_call.1} parent=1 // pred_region
      %86 = dma.done [#allocation3], 22400
    $region33: #{tpu_custom_call.1} parent=1 // pred_fallthru
      _
    // Predicated region
    $region34: #{tpu_custom_call.1} parent=1 // pred_check
      _
    $region35: #{tpu_custom_call.1} parent=1 // pred_check_branch
      %88 = sbr.rel (0) target = $region37
    $region36: #{tpu_custom_call.1} parent=1 // pred_region
      %90 = dma.done [#allocation6], 12544
    $region37: #{tpu_custom_call.1} parent=1 // pred_fallthru
      _
    // Predicated region
    $region38: #{tpu_custom_call.1} parent=1 // pred_check
      _
    $region39: #{tpu_custom_call.1} parent=1 // pred_check_branch
      %92 = sbr.rel (0) target = $region41
    $region40: #{tpu_custom_call.1} parent=1 // pred_region
      %94 = dma.done [#allocation6], 32
    $region41: #{tpu_custom_call.1} parent=1 // pred_fallthru
      _
    // Predicated region
    $region42: #{tpu_custom_call.1} parent=1 // pred_check
      _
    $region43: #{tpu_custom_call.1} parent=1 // pred_check_branch
      %96 = sbr.rel (0) target = $region45
    $region44: #{tpu_custom_call.1} parent=1 // pred_region
      %98 = dma.done [#allocation9], 4096
    $region45: #{tpu_custom_call.1} parent=1 // pred_fallthru
      _
    // Predicated region
    $region46: #{tpu_custom_call.1} parent=1 // pred_check
      _
    $region47: #{tpu_custom_call.1} parent=1 // pred_check_branch
      %100 = sbr.rel (0) target = $region49
    $region48: #{tpu_custom_call.1} parent=1 // pred_region
      %102 = dma.done [#allocation9], 2048
    $region49: #{tpu_custom_call.1} parent=1 // pred_fallthru
      _
    %v104 = vld [vmem:[#allocation2] sm:$0xff]
    %v105 = vld [vmem:[#allocation2 + $0x8] sm:$0xff]
    %v106 = vld [vmem:[#allocation2 + $0x10] sm:$0xff]
    %v107 = vld [vmem:[#allocation2 + $0x18] sm:$0xff]
    %v108 = vld [vmem:[#allocation2 + $0x20] sm:$0xff]
    %v109 = vld [vmem:[#allocation2 + $0x28] sm:$0xff]
    %v110 = vld [vmem:[#allocation2 + $0x30] sm:$0xff]
    %v111 = vld [vmem:[#allocation2 + $0x38] sm:$0xff]
    %v112 = vld [vmem:[#allocation2 + $0x40] sm:$0xff]
    %v113 = vld [vmem:[#allocation2 + $0x48] sm:$0xff]
    %v114 = vld [vmem:[#allocation2 + $0x50] sm:$0xff]
    %v115 = vld [vmem:[#allocation2 + $0x58] sm:$0xff]
    %v116 = vld [vmem:[#allocation2 + $0x60] sm:$0xff]
    %v117 = vld [vmem:[#allocation2 + $0x68] sm:$0xff]
    %v118 = vld [vmem:[#allocation2 + $0x70] sm:$0xff]
    %v119 = vld [vmem:[#allocation2 + $0x78] sm:$0xff]
    %v120 = vld [vmem:[#allocation2 + $0x80] sm:$0xff]
    %v121 = vld [vmem:[#allocation2 + $0x88] sm:$0xff]
    %v122 = vld [vmem:[#allocation2 + $0x90] sm:$0xff]
    %v123 = vld [vmem:[#allocation2 + $0x98] sm:$0xff]
    %v124 = vld [vmem:[#allocation2 + $0xa0] sm:$0xff]
    %v125 = vld [vmem:[#allocation2 + $0xa8] sm:$0xff]
    %v126 = vld [vmem:[#allocation2 + $0xb0] sm:$0xff]
    %v127 = vld [vmem:[#allocation2 + $0xb8] sm:$0xff]
    %v128 = vld [vmem:[#allocation2 + $0xc0] sm:$0xff]
    %v129 = vld [vmem:[#allocation2 + $0xc8] sm:$0xff]
    %v130 = vld [vmem:[#allocation2 + $0xd0] sm:$0xff]
    %v131 = vld [vmem:[#allocation2 + $0xd8] sm:$0xff]
    %v132 = vld [vmem:[#allocation2 + $0xe0] sm:$0xff]
    %v133 = vld [vmem:[#allocation2 + $0xe8] sm:$0xff]
    %v134 = vld [vmem:[#allocation2 + $0xf0] sm:$0xff]
    %v135 = vld [vmem:[#allocation2 + $0xf8] sm:$0xff]
    %v136 = vld [vmem:[#allocation2 + $0x100] sm:$0xff]
    %v137 = vld [vmem:[#allocation2 + $0x108] sm:$0xff]
    %v138 = vld [vmem:[#allocation2 + $0x110] sm:$0xff]
    %v139 = vld [vmem:[#allocation2 + $0x118] sm:$0xff]
    %v140 = vld [vmem:[#allocation2 + $0x120] sm:$0xff]
    %v141 = vld [vmem:[#allocation2 + $0x128] sm:$0xff]
    %v142 = vld [vmem:[#allocation2 + $0x130] sm:$0xff]
    %v143 = vld [vmem:[#allocation2 + $0x138] sm:$0xff]
    %v144 = vld [vmem:[#allocation2 + $0x140] sm:$0xff]
    %v145 = vld [vmem:[#allocation2 + $0x148] sm:$0xff]
    %v146 = vld [vmem:[#allocation2 + $0x150] sm:$0xff]
    %v147 = vld [vmem:[#allocation2 + $0x158] sm:$0xff]
    %v148 = vld [vmem:[#allocation2 + $0x160] sm:$0xff]
    %v149 = vld [vmem:[#allocation2 + $0x168] sm:$0xff]
    %v150 = vld [vmem:[#allocation2 + $0x170] sm:$0xff]
    %v151 = vld [vmem:[#allocation2 + $0x178] sm:$0xff]
    %v152 = vld [vmem:[#allocation2 + $0x180] sm:$0xff]
    %v153 = vld [vmem:[#allocation2 + $0x188] sm:$0xff]
    %v154 = vld [vmem:[#allocation2 + $0x190] sm:$0xff]
    %v155 = vld [vmem:[#allocation2 + $0x198] sm:$0xff]
    %v156 = vld [vmem:[#allocation2 + $0x1a0] sm:$0xff]
    %v157 = vld [vmem:[#allocation2 + $0x1a8] sm:$0xff]
    %v158 = vld [vmem:[#allocation2 + $0x1b0] sm:$0xff]
    %v159 = vld [vmem:[#allocation2 + $0x1b8] sm:$0xff]
    %v160 = vld [vmem:[#allocation2 + $0x1c0] sm:$0xff]
    %v161 = vld [vmem:[#allocation2 + $0x1c8] sm:$0xff]
    %v162 = vld [vmem:[#allocation2 + $0x1d0] sm:$0xff]
    %v163 = vld [vmem:[#allocation2 + $0x1d8] sm:$0xff]
    %v164 = vld [vmem:[#allocation2 + $0x1e0] sm:$0xff]
    %v165 = vld [vmem:[#allocation2 + $0x1e8] sm:$0xff]
    %v166 = vld [vmem:[#allocation2 + $0x1f0] sm:$0xff]
    %v167 = vld [vmem:[#allocation2 + $0x1f8] sm:$0xff]
    %v168 = vld [vmem:[#allocation2 + $0x200] sm:$0xff]
    %v169 = vld [vmem:[#allocation2 + $0x208] sm:$0xff]
    %v170 = vld [vmem:[#allocation2 + $0x210] sm:$0xff]
    %v171 = vld [vmem:[#allocation2 + $0x218] sm:$0xff]
    %v172 = vld [vmem:[#allocation2 + $0x220] sm:$0xff]
    %v173 = vld [vmem:[#allocation2 + $0x228] sm:$0xff]
    %v174 = vld [vmem:[#allocation2 + $0x230] sm:$0xff]
    %v175 = vld [vmem:[#allocation2 + $0x238] sm:$0xff]
    %v176 = vld [vmem:[#allocation2 + $0x240] sm:$0xff]
    %v177 = vld [vmem:[#allocation2 + $0x248] sm:$0xff]
    %v178 = vld [vmem:[#allocation2 + $0x250] sm:$0xff]
    %v179 = vld [vmem:[#allocation2 + $0x258] sm:$0xff]
    %v180 = vld [vmem:[#allocation2 + $0x260] sm:$0xff]
    %v181 = vld [vmem:[#allocation2 + $0x268] sm:$0xff]
    %v182 = vld [vmem:[#allocation2 + $0x270] sm:$0xff]
    %v183 = vld [vmem:[#allocation2 + $0x278] sm:$0xff]
    %v184 = vld [vmem:[#allocation2 + $0x280] sm:$0xff]
    %v185 = vld [vmem:[#allocation2 + $0x288] sm:$0xff]
    %v186 = vld [vmem:[#allocation2 + $0x290] sm:$0xff]
    %v187 = vld [vmem:[#allocation2 + $0x298] sm:$0xff]
    %v188 = vld [vmem:[#allocation2 + $0x2a0] sm:$0xff]
    %v189 = vld [vmem:[#allocation2 + $0x2a8] sm:$0xff]
    %v190 = vld [vmem:[#allocation2 + $0x2b0] sm:$0xff]
    %v191 = vld [vmem:[#allocation2 + $0x2b8] sm:$0xff]
    %v192 = vld [vmem:[#allocation2 + $0x2c0] sm:$0xff]
    %v193 = vld [vmem:[#allocation2 + $0x2c8] sm:$0xff]
    %v194 = vld [vmem:[#allocation2 + $0x2d0] sm:$0xff]
    %v195 = vld [vmem:[#allocation2 + $0x2d8] sm:$0xff]
    %v196 = vld [vmem:[#allocation2 + $0x2e0] sm:$0xff]
    %v197 = vld [vmem:[#allocation2 + $0x2e8] sm:$0xff]
    %v198 = vld [vmem:[#allocation2 + $0x2f0] sm:$0xff]
    %v199 = vld [vmem:[#allocation2 + $0x2f8] sm:$0xff]
    %v200 = vld [vmem:[#allocation2 + $0x300] sm:$0xff]
    %v201 = vld [vmem:[#allocation2 + $0x308] sm:$0xff]
    %v202 = vld [vmem:[#allocation2 + $0x310] sm:$0xff]
    %v203 = vld [vmem:[#allocation2 + $0x318] sm:$0xff]
    %v204 = vld [vmem:[#allocation2 + $0x320] sm:$0xff]
    %v205 = vld [vmem:[#allocation2 + $0x328] sm:$0xff]
    %v206 = vld [vmem:[#allocation2 + $0x330] sm:$0xff]
    %v207 = vld [vmem:[#allocation2 + $0x338] sm:$0xff]
    %v208 = vld [vmem:[#allocation2 + $0x340] sm:$0xff]
    %v209 = vld [vmem:[#allocation2 + $0x348] sm:$0xff]
    %v210 = vld [vmem:[#allocation2 + $0x350] sm:$0xff]
    %v211 = vld [vmem:[#allocation2 + $0x358] sm:$0xff]
    %v212 = vld [vmem:[#allocation2 + $0x360] sm:$0xff]
    %v213 = vld [vmem:[#allocation2 + $0x368] sm:$0xff]
    %v214 = vld [vmem:[#allocation2 + $0x370] sm:$0xff]
    %v215 = vld [vmem:[#allocation2 + $0x378] sm:$0xff]
    %v216 = vld [vmem:[#allocation2 + $0x380] sm:$0xff]
    %v217 = vld [vmem:[#allocation2 + $0x388] sm:$0xff]
    %v218 = vld [vmem:[#allocation2 + $0x390] sm:$0xff]
    %v219 = vld [vmem:[#allocation2 + $0x398] sm:$0xff]
    %v220 = vld [vmem:[#allocation2 + $0x3a0] sm:$0xff]
    %v221 = vld [vmem:[#allocation2 + $0x3a8] sm:$0xff]
    %v222 = vld [vmem:[#allocation2 + $0x3b0] sm:$0xff]
    %v223 = vld [vmem:[#allocation2 + $0x3b8] sm:$0xff]
    %v224 = vld [vmem:[#allocation2 + $0x3c0] sm:$0xff]
    %v225 = vld [vmem:[#allocation2 + $0x3c8] sm:$0xff]
    %v226 = vld [vmem:[#allocation2 + $0x3d0] sm:$0xff]
    %v227 = vld [vmem:[#allocation2 + $0x3d8] sm:$0xff]
    %v228 = vld [vmem:[#allocation2 + $0x3e0] sm:$0xff]
    %v229 = vld [vmem:[#allocation2 + $0x3e8] sm:$0xff]
    %v230 = vld [vmem:[#allocation2 + $0x3f0] sm:$0xff]
    %v231 = vld [vmem:[#allocation2 + $0x3f8] sm:$0xff]
    %v232 = vld [vmem:[#allocation2 + $0x400] sm:$0xff]
    %v233 = vld [vmem:[#allocation2 + $0x408] sm:$0xff]
    %v234 = vld [vmem:[#allocation2 + $0x410] sm:$0xff]
    %v235 = vld [vmem:[#allocation2 + $0x418] sm:$0xff]
    %v236 = vld [vmem:[#allocation2 + $0x420] sm:$0xff]
    %v237 = vld [vmem:[#allocation2 + $0x428] sm:$0xff]
    %v238 = vld [vmem:[#allocation2 + $0x430] sm:$0xff]
    %v239 = vld [vmem:[#allocation2 + $0x438] sm:$0xff]
    %v240 = vld [vmem:[#allocation2 + $0x440] sm:$0xff]
    %v241 = vld [vmem:[#allocation2 + $0x448] sm:$0xff]
    %v242 = vld [vmem:[#allocation2 + $0x450] sm:$0xff]
    %v243 = vld [vmem:[#allocation2 + $0x458] sm:$0xff]
    %v244 = vld [vmem:[#allocation2 + $0x460] sm:$0xff]
    %v245 = vld [vmem:[#allocation2 + $0x468] sm:$0xff]
    %v246 = vld [vmem:[#allocation2 + $0x470] sm:$0xff]
    %v247 = vld [vmem:[#allocation2 + $0x478] sm:$0xff]
    %v248 = vld [vmem:[#allocation2 + $0x480] sm:$0xff]
    %v249 = vld [vmem:[#allocation2 + $0x488] sm:$0xff]
    %v250 = vld [vmem:[#allocation2 + $0x490] sm:$0xff]
    %v251 = vld [vmem:[#allocation2 + $0x498] sm:$0xff]
    %v252 = vld [vmem:[#allocation2 + $0x4a0] sm:$0xff]
    %v253 = vld [vmem:[#allocation2 + $0x4a8] sm:$0xff]
    %v254 = vld [vmem:[#allocation2 + $0x4b0] sm:$0xff]
    %v255 = vld [vmem:[#allocation2 + $0x4b8] sm:$0xff]
    %v256 = vld [vmem:[#allocation2 + $0x4c0] sm:$0xff]
    %v257 = vld [vmem:[#allocation2 + $0x4c8] sm:$0xff]
    %v258 = vld [vmem:[#allocation2 + $0x4d0] sm:$0xff]
    %v259 = vld [vmem:[#allocation2 + $0x4d8] sm:$0xff]
    %v260 = vld [vmem:[#allocation2 + $0x4e0] sm:$0xff]
    %v261 = vld [vmem:[#allocation2 + $0x4e8] sm:$0xff]
    %v262 = vld [vmem:[#allocation2 + $0x4f0] sm:$0xff]
    %v263 = vld [vmem:[#allocation2 + $0x4f8] sm:$0xff]
    %v264 = vld [vmem:[#allocation2 + $0x500] sm:$0xff]
    %v265 = vld [vmem:[#allocation2 + $0x508] sm:$0xff]
    %v266 = vld [vmem:[#allocation2 + $0x510] sm:$0xff]
    %v267 = vld [vmem:[#allocation2 + $0x518] sm:$0xff]
    %v268 = vld [vmem:[#allocation2 + $0x520] sm:$0xff]
    %v269 = vld [vmem:[#allocation2 + $0x528] sm:$0xff]
    %v270 = vld [vmem:[#allocation2 + $0x530] sm:$0xff]
    %v271 = vld [vmem:[#allocation2 + $0x538] sm:$0xff]
    %v272 = vld [vmem:[#allocation2 + $0x540] sm:$0xff]
    %v273 = vld [vmem:[#allocation2 + $0x548] sm:$0xff]
    %v274 = vld [vmem:[#allocation2 + $0x550] sm:$0xff]
    %v275 = vld [vmem:[#allocation2 + $0x558] sm:$0xff]
    %v276 = vld [vmem:[#allocation2 + $0x560] sm:$0xff]
    %v277 = vld [vmem:[#allocation2 + $0x568] sm:$0xff]
    %v278 = vld [vmem:[#allocation2 + $0x570] sm:$0xff]
    %v279 = vpack.c.bf16 %v111, %v104
    %v280 = vpack.c.bf16 %v112, %v105
    %v281 = vpack.c.bf16 %v113, %v106
    %v282 = vpack.c.bf16 %v114, %v107
    %v283 = vpack.c.bf16 %v115, %v108
    %v284 = vpack.c.bf16 %v116, %v109
    %v285 = vpack.c.bf16 %v117, %v110
    %v286 = vpack.c.bf16 %v125, %v118
    %v287 = vpack.c.bf16 %v126, %v119
    %v288 = vpack.c.bf16 %v127, %v120
    %v289 = vpack.c.bf16 %v128, %v121
    %v290 = vpack.c.bf16 %v129, %v122
    %v291 = vpack.c.bf16 %v130, %v123
    %v292 = vpack.c.bf16 %v131, %v124
    %v293 = vpack.c.bf16 %v139, %v132
    %v294 = vpack.c.bf16 %v140, %v133
    %v295 = vpack.c.bf16 %v141, %v134
    %v296 = vpack.c.bf16 %v142, %v135
    %v297 = vpack.c.bf16 %v143, %v136
    %v298 = vpack.c.bf16 %v144, %v137
    %v299 = vpack.c.bf16 %v145, %v138
    %v300 = vpack.c.bf16 %v153, %v146
    %v301 = vpack.c.bf16 %v154, %v147
    %v302 = vpack.c.bf16 %v155, %v148
    %v303 = vpack.c.bf16 %v156, %v149
    %v304 = vpack.c.bf16 %v157, %v150
    %v305 = vpack.c.bf16 %v158, %v151
    %v306 = vpack.c.bf16 %v159, %v152
    %v307 = vpack.c.bf16 %v167, %v160
    %v308 = vpack.c.bf16 %v168, %v161
    %v309 = vpack.c.bf16 %v169, %v162
    %v310 = vpack.c.bf16 %v170, %v163
    %v311 = vpack.c.bf16 %v171, %v164
    %v312 = vpack.c.bf16 %v172, %v165
    %v313 = vpack.c.bf16 %v173, %v166
    %v314 = vpack.c.bf16 %v181, %v174
    %v315 = vpack.c.bf16 %v182, %v175
    %v316 = vpack.c.bf16 %v183, %v176
    %v317 = vpack.c.bf16 %v184, %v177
    %v318 = vpack.c.bf16 %v185, %v178
    %v319 = vpack.c.bf16 %v186, %v179
    %v320 = vpack.c.bf16 %v187, %v180
    %v321 = vpack.c.bf16 %v195, %v188
    %v322 = vpack.c.bf16 %v196, %v189
    %v323 = vpack.c.bf16 %v197, %v190
    %v324 = vpack.c.bf16 %v198, %v191
    %v325 = vpack.c.bf16 %v199, %v192
    %v326 = vpack.c.bf16 %v200, %v193
    %v327 = vpack.c.bf16 %v201, %v194
    %v328 = vpack.c.bf16 %v209, %v202
    %v329 = vpack.c.bf16 %v210, %v203
    %v330 = vpack.c.bf16 %v211, %v204
    %v331 = vpack.c.bf16 %v212, %v205
    %v332 = vpack.c.bf16 %v213, %v206
    %v333 = vpack.c.bf16 %v214, %v207
    %v334 = vpack.c.bf16 %v215, %v208
    %v335 = vpack.c.bf16 %v223, %v216
    %v336 = vpack.c.bf16 %v224, %v217
    %v337 = vpack.c.bf16 %v225, %v218
    %v338 = vpack.c.bf16 %v226, %v219
    %v339 = vpack.c.bf16 %v227, %v220
    %v340 = vpack.c.bf16 %v228, %v221
    %v341 = vpack.c.bf16 %v229, %v222
    %v342 = vpack.c.bf16 %v237, %v230
    %v343 = vpack.c.bf16 %v238, %v231
    %v344 = vpack.c.bf16 %v239, %v232
    %v345 = vpack.c.bf16 %v240, %v233
    %v346 = vpack.c.bf16 %v241, %v234
    %v347 = vpack.c.bf16 %v242, %v235
    %v348 = vpack.c.bf16 %v243, %v236
    %v349 = vpack.c.bf16 %v251, %v244
    %v350 = vpack.c.bf16 %v252, %v245
    %v351 = vpack.c.bf16 %v253, %v246
    %v352 = vpack.c.bf16 %v254, %v247
    %v353 = vpack.c.bf16 %v255, %v248
    %v354 = vpack.c.bf16 %v256, %v249
    %v355 = vpack.c.bf16 %v257, %v250
    %v356 = vpack.c.bf16 %v265, %v258
    %v357 = vpack.c.bf16 %v266, %v259
    %v358 = vpack.c.bf16 %v267, %v260
    %v359 = vpack.c.bf16 %v268, %v261
    %v360 = vpack.c.bf16 %v269, %v262
    %v361 = vpack.c.bf16 %v270, %v263
    %v362 = vpack.c.bf16 %v271, %v264
    %v363 = vpack.c.bf16 %v272, %v272
    %v364 = vpack.c.bf16 %v273, %v273
    %v365 = vpack.c.bf16 %v274, %v274
    %v366 = vpack.c.bf16 %v275, %v275
    %v367 = vpack.c.bf16 %v276, %v276
    %v368 = vpack.c.bf16 %v277, %v277
    %v369 = vpack.c.bf16 %v278, %v278
    %v370 = vld [vmem:[#allocation5] sm:$0xff]
    %v371 = vld [vmem:[#allocation5 + $0x8] sm:$0xff]
    %v372 = vld [vmem:[#allocation5 + $0x10] sm:$0xff]
    %v373 = vld [vmem:[#allocation5 + $0x18] sm:$0xff]
    %v374 = vld [vmem:[#allocation5 + $0x20] sm:$0xff]
    %v375 = vld [vmem:[#allocation5 + $0x28] sm:$0xff]
    %v376 = vld [vmem:[#allocation5 + $0x30] sm:$0xff]
    %v377 = vld [vmem:[#allocation5 + $0x38] sm:$0xff]
    %v378 = vld [vmem:[#allocation5 + $0x40] sm:$0xff]
    %v379 = vld [vmem:[#allocation5 + $0x48] sm:$0xff]
    %v380 = vld [vmem:[#allocation5 + $0x50] sm:$0xff]
    %v381 = vld [vmem:[#allocation5 + $0x58] sm:$0xff]
    %v382 = vld [vmem:[#allocation5 + $0x60] sm:$0xff]
    %v383 = vld [vmem:[#allocation5 + $0x68] sm:$0xff]
    %v384 = vld [vmem:[#allocation5 + $0x70] sm:$0xff]
    %v385 = vld [vmem:[#allocation5 + $0x78] sm:$0xff]
    %v386 = vld [vmem:[#allocation5 + $0x80] sm:$0xff]
    %v387 = vld [vmem:[#allocation5 + $0x88] sm:$0xff]
    %v388 = vld [vmem:[#allocation5 + $0x90] sm:$0xff]
    %v389 = vld [vmem:[#allocation5 + $0x98] sm:$0xff]
    %v390 = vld [vmem:[#allocation5 + $0xa0] sm:$0xff]
    %v391 = vld [vmem:[#allocation5 + $0xa8] sm:$0xff]
    %v392 = vld [vmem:[#allocation5 + $0xb0] sm:$0xff]
    %v393 = vld [vmem:[#allocation5 + $0xb8] sm:$0xff]
    %v394 = vld [vmem:[#allocation5 + $0xc0] sm:$0xff]
    %v395 = vld [vmem:[#allocation5 + $0xc8] sm:$0xff]
    %v396 = vld [vmem:[#allocation5 + $0xd0] sm:$0xff]
    %v397 = vld [vmem:[#allocation5 + $0xd8] sm:$0xff]
    %v398 = vld [vmem:[#allocation5 + $0xe0] sm:$0xff]
    %v399 = vld [vmem:[#allocation5 + $0xe8] sm:$0xff]
    %v400 = vld [vmem:[#allocation5 + $0xf0] sm:$0xff]
    %v401 = vld [vmem:[#allocation5 + $0xf8] sm:$0xff]
    %v402 = vld [vmem:[#allocation5 + $0x100] sm:$0xff]
    %v403 = vld [vmem:[#allocation5 + $0x108] sm:$0xff]
    %v404 = vld [vmem:[#allocation5 + $0x110] sm:$0xff]
    %v405 = vld [vmem:[#allocation5 + $0x118] sm:$0xff]
    %v406 = vld [vmem:[#allocation5 + $0x120] sm:$0xff]
    %v407 = vld [vmem:[#allocation5 + $0x128] sm:$0xff]
    %v408 = vld [vmem:[#allocation5 + $0x130] sm:$0xff]
    %v409 = vld [vmem:[#allocation5 + $0x138] sm:$0xff]
    %v410 = vld [vmem:[#allocation5 + $0x140] sm:$0xff]
    %v411 = vld [vmem:[#allocation5 + $0x148] sm:$0xff]
    %v412 = vld [vmem:[#allocation5 + $0x150] sm:$0xff]
    %v413 = vld [vmem:[#allocation5 + $0x158] sm:$0xff]
    %v414 = vld [vmem:[#allocation5 + $0x160] sm:$0xff]
    %v415 = vld [vmem:[#allocation5 + $0x168] sm:$0xff]
    %v416 = vld [vmem:[#allocation5 + $0x170] sm:$0xff]
    %v417 = vld [vmem:[#allocation5 + $0x178] sm:$0xff]
    %v418 = vld [vmem:[#allocation5 + $0x180] sm:$0xff]
    %v419 = vld [vmem:[#allocation5 + $0x188] sm:$0xff]
    %v420 = vld [vmem:[#allocation5 + $0x190] sm:$0xff]
    %v421 = vld [vmem:[#allocation5 + $0x198] sm:$0xff]
    %v422 = vld [vmem:[#allocation5 + $0x1a0] sm:$0xff]
    %v423 = vld [vmem:[#allocation5 + $0x1a8] sm:$0xff]
    %v424 = vld [vmem:[#allocation5 + $0x1b0] sm:$0xff]
    %v425 = vld [vmem:[#allocation5 + $0x1b8] sm:$0xff]
    %v426 = vld [vmem:[#allocation5 + $0x1c0] sm:$0xff]
    %v427 = vld [vmem:[#allocation5 + $0x1c8] sm:$0xff]
    %v428 = vld [vmem:[#allocation5 + $0x1d0] sm:$0xff]
    %v429 = vld [vmem:[#allocation5 + $0x1d8] sm:$0xff]
    %v430 = vld [vmem:[#allocation5 + $0x1e0] sm:$0xff]
    %v431 = vld [vmem:[#allocation5 + $0x1e8] sm:$0xff]
    %v432 = vld [vmem:[#allocation5 + $0x1f0] sm:$0xff]
    %v433 = vld [vmem:[#allocation5 + $0x1f8] sm:$0xff]
    %v434 = vld [vmem:[#allocation5 + $0x200] sm:$0xff]
    %v435 = vld [vmem:[#allocation5 + $0x208] sm:$0xff]
    %v436 = vld [vmem:[#allocation5 + $0x210] sm:$0xff]
    %v437 = vld [vmem:[#allocation5 + $0x218] sm:$0xff]
    %v438 = vld [vmem:[#allocation5 + $0x220] sm:$0xff]
    %v439 = vld [vmem:[#allocation5 + $0x228] sm:$0xff]
    %v440 = vld [vmem:[#allocation5 + $0x230] sm:$0xff]
    %v441 = vld [vmem:[#allocation5 + $0x238] sm:$0xff]
    %v442 = vld [vmem:[#allocation5 + $0x240] sm:$0xff]
    %v443 = vld [vmem:[#allocation5 + $0x248] sm:$0xff]
    %v444 = vld [vmem:[#allocation5 + $0x250] sm:$0xff]
    %v445 = vld [vmem:[#allocation5 + $0x258] sm:$0xff]
    %v446 = vld [vmem:[#allocation5 + $0x260] sm:$0xff]
    %v447 = vld [vmem:[#allocation5 + $0x268] sm:$0xff]
    %v448 = vld [vmem:[#allocation5 + $0x270] sm:$0xff]
    %v449 = vld [vmem:[#allocation5 + $0x278] sm:$0xff]
    %v450 = vld [vmem:[#allocation5 + $0x280] sm:$0xff]
    %v451 = vld [vmem:[#allocation5 + $0x288] sm:$0xff]
    %v452 = vld [vmem:[#allocation5 + $0x290] sm:$0xff]
    %v453 = vld [vmem:[#allocation5 + $0x298] sm:$0xff]
    %v454 = vld [vmem:[#allocation5 + $0x2a0] sm:$0xff]
    %v455 = vld [vmem:[#allocation5 + $0x2a8] sm:$0xff]
    %v456 = vld [vmem:[#allocation5 + $0x2b0] sm:$0xff]
    %v457 = vld [vmem:[#allocation5 + $0x2b8] sm:$0xff]
    %v458 = vld [vmem:[#allocation5 + $0x2c0] sm:$0xff]
    %v459 = vld [vmem:[#allocation5 + $0x2c8] sm:$0xff]
    %v460 = vld [vmem:[#allocation5 + $0x2d0] sm:$0xff]
    %v461 = vld [vmem:[#allocation5 + $0x2d8] sm:$0xff]
    %v462 = vld [vmem:[#allocation5 + $0x2e0] sm:$0xff]
    %v463 = vld [vmem:[#allocation5 + $0x2e8] sm:$0xff]
    %v464 = vld [vmem:[#allocation5 + $0x2f0] sm:$0xff]
    %v465 = vld [vmem:[#allocation5 + $0x2f8] sm:$0xff]
    %v466 = vld [vmem:[#allocation5 + $0x300] sm:$0xff]
    %v467 = vld [vmem:[#allocation5 + $0x308] sm:$0xff]
    %v468 = vld [vmem:[#allocation7] sm:$0x3]
    %v470 = vperm.slane %v468, 0
    %v471 = vperm.slane %v468, 1
    %v572 = vunpack.c.l.b16 %v370
    %v573 = vunpack.c.h.b16 %v370
    %v574 = vunpack.c.l.b16 %v371
    %v575 = vunpack.c.h.b16 %v371
    %v576 = vunpack.c.l.b16 %v372
    %v577 = vunpack.c.h.b16 %v372
    %v578 = vunpack.c.l.b16 %v373
    %v579 = vunpack.c.h.b16 %v373
    %v580 = vunpack.c.l.b16 %v374
    %v581 = vunpack.c.h.b16 %v374
    %v582 = vunpack.c.l.b16 %v375
    %v583 = vunpack.c.h.b16 %v375
    %v584 = vunpack.c.l.b16 %v376
    %v585 = vunpack.c.h.b16 %v376
    %v586 = vunpack.c.l.b16 %v377
    %v587 = vunpack.c.h.b16 %v377
    %v588 = vunpack.c.l.b16 %v378
    %v589 = vunpack.c.h.b16 %v378
    %v590 = vunpack.c.l.b16 %v379
    %v591 = vunpack.c.h.b16 %v379
    %v592 = vunpack.c.l.b16 %v380
    %v593 = vunpack.c.h.b16 %v380
    %v594 = vunpack.c.l.b16 %v381
    %v595 = vunpack.c.h.b16 %v381
    %v596 = vunpack.c.l.b16 %v382
    %v597 = vunpack.c.h.b16 %v382
    %v598 = vunpack.c.l.b16 %v383
    %v599 = vunpack.c.h.b16 %v383
    %v600 = vunpack.c.l.b16 %v384
    %v601 = vunpack.c.h.b16 %v384
    %v602 = vunpack.c.l.b16 %v385
    %v603 = vunpack.c.h.b16 %v385
    %v604 = vunpack.c.l.b16 %v386
    %v605 = vunpack.c.h.b16 %v386
    %v606 = vunpack.c.l.b16 %v387
    %v607 = vunpack.c.h.b16 %v387
    %v608 = vunpack.c.l.b16 %v388
    %v609 = vunpack.c.h.b16 %v388
    %v610 = vunpack.c.l.b16 %v389
    %v611 = vunpack.c.h.b16 %v389
    %v612 = vunpack.c.l.b16 %v390
    %v613 = vunpack.c.h.b16 %v390
    %v614 = vunpack.c.l.b16 %v391
    %v615 = vunpack.c.h.b16 %v391
    %v616 = vunpack.c.l.b16 %v392
    %v617 = vunpack.c.h.b16 %v392
    %v618 = vunpack.c.l.b16 %v393
    %v619 = vunpack.c.h.b16 %v393
    %v620 = vunpack.c.l.b16 %v394
    %v621 = vunpack.c.h.b16 %v394
    %v622 = vunpack.c.l.b16 %v395
    %v623 = vunpack.c.h.b16 %v395
    %v624 = vunpack.c.l.b16 %v396
    %v625 = vunpack.c.h.b16 %v396
    %v626 = vunpack.c.l.b16 %v397
    %v627 = vunpack.c.h.b16 %v397
    %v628 = vunpack.c.l.b16 %v398
    %v629 = vunpack.c.h.b16 %v398
    %v630 = vunpack.c.l.b16 %v399
    %v631 = vunpack.c.h.b16 %v399
    %v632 = vunpack.c.l.b16 %v400
    %v633 = vunpack.c.h.b16 %v400
    %v634 = vunpack.c.l.b16 %v401
    %v635 = vunpack.c.h.b16 %v401
    %v636 = vunpack.c.l.b16 %v402
    %v637 = vunpack.c.h.b16 %v402
    %v638 = vunpack.c.l.b16 %v403
    %v639 = vunpack.c.h.b16 %v403
    %v640 = vunpack.c.l.b16 %v404
    %v641 = vunpack.c.h.b16 %v404
    %v642 = vunpack.c.l.b16 %v405
    %v643 = vunpack.c.h.b16 %v405
    %v644 = vunpack.c.l.b16 %v406
    %v645 = vunpack.c.h.b16 %v406
    %v646 = vunpack.c.l.b16 %v407
    %v647 = vunpack.c.h.b16 %v407
    %v648 = vunpack.c.l.b16 %v408
    %v649 = vunpack.c.h.b16 %v408
    %v650 = vunpack.c.l.b16 %v409
    %v651 = vunpack.c.h.b16 %v409
    %v652 = vunpack.c.l.b16 %v410
    %v653 = vunpack.c.h.b16 %v410
    %v654 = vunpack.c.l.b16 %v411
    %v655 = vunpack.c.h.b16 %v411
    %v656 = vunpack.c.l.b16 %v412
    %v657 = vunpack.c.h.b16 %v412
    %v658 = vunpack.c.l.b16 %v413
    %v659 = vunpack.c.h.b16 %v413
    %v660 = vunpack.c.l.b16 %v414
    %v661 = vunpack.c.h.b16 %v414
    %v662 = vunpack.c.l.b16 %v415
    %v663 = vunpack.c.h.b16 %v415
    %v664 = vunpack.c.l.b16 %v416
    %v665 = vunpack.c.h.b16 %v416
    %v666 = vunpack.c.l.b16 %v417
    %v667 = vunpack.c.h.b16 %v417
    %v668 = vunpack.c.l.b16 %v418
    %v669 = vunpack.c.h.b16 %v418
    %v670 = vunpack.c.l.b16 %v419
    %v671 = vunpack.c.h.b16 %v419
    %v672 = vunpack.c.l.b16 %v420
    %v673 = vunpack.c.h.b16 %v420
    %v674 = vunpack.c.l.b16 %v421
    %v675 = vunpack.c.h.b16 %v421
    %v676 = vunpack.c.l.b16 %v422
    %v677 = vunpack.c.h.b16 %v422
    %v678 = vunpack.c.l.b16 %v423
    %v679 = vunpack.c.h.b16 %v423
    %v680 = vunpack.c.l.b16 %v424
    %v681 = vunpack.c.h.b16 %v424
    %v682 = vunpack.c.l.b16 %v425
    %v683 = vunpack.c.h.b16 %v425
    %v684 = vunpack.c.l.b16 %v426
    %v685 = vunpack.c.h.b16 %v426
    %v686 = vunpack.c.l.b16 %v427
    %v687 = vunpack.c.h.b16 %v427
    %v688 = vunpack.c.l.b16 %v428
    %v689 = vunpack.c.h.b16 %v428
    %v690 = vunpack.c.l.b16 %v429
    %v691 = vunpack.c.h.b16 %v429
    %v692 = vunpack.c.l.b16 %v430
    %v693 = vunpack.c.h.b16 %v430
    %v694 = vunpack.c.l.b16 %v431
    %v695 = vunpack.c.h.b16 %v431
    %v696 = vunpack.c.l.b16 %v432
    %v697 = vunpack.c.h.b16 %v432
    %v698 = vunpack.c.l.b16 %v433
    %v699 = vunpack.c.h.b16 %v433
    %v700 = vunpack.c.l.b16 %v434
    %v701 = vunpack.c.h.b16 %v434
    %v702 = vunpack.c.l.b16 %v435
    %v703 = vunpack.c.h.b16 %v435
    %v704 = vunpack.c.l.b16 %v436
    %v705 = vunpack.c.h.b16 %v436
    %v706 = vunpack.c.l.b16 %v437
    %v707 = vunpack.c.h.b16 %v437
    %v708 = vunpack.c.l.b16 %v438
    %v709 = vunpack.c.h.b16 %v438
    %v710 = vunpack.c.l.b16 %v439
    %v711 = vunpack.c.h.b16 %v439
    %v712 = vunpack.c.l.b16 %v440
    %v713 = vunpack.c.h.b16 %v440
    %v714 = vunpack.c.l.b16 %v441
    %v715 = vunpack.c.h.b16 %v441
    %v716 = vunpack.c.l.b16 %v442
    %v717 = vunpack.c.h.b16 %v442
    %v718 = vunpack.c.l.b16 %v443
    %v719 = vunpack.c.h.b16 %v443
    %v720 = vunpack.c.l.b16 %v444
    %v721 = vunpack.c.h.b16 %v444
    %v722 = vunpack.c.l.b16 %v445
    %v723 = vunpack.c.h.b16 %v445
    %v724 = vunpack.c.l.b16 %v446
    %v725 = vunpack.c.h.b16 %v446
    %v726 = vunpack.c.l.b16 %v447
    %v727 = vunpack.c.h.b16 %v447
    %v728 = vunpack.c.l.b16 %v448
    %v729 = vunpack.c.h.b16 %v448
    %v730 = vunpack.c.l.b16 %v449
    %v731 = vunpack.c.h.b16 %v449
    %v732 = vunpack.c.l.b16 %v450
    %v733 = vunpack.c.h.b16 %v450
    %v734 = vunpack.c.l.b16 %v451
    %v735 = vunpack.c.h.b16 %v451
    %v736 = vunpack.c.l.b16 %v452
    %v737 = vunpack.c.h.b16 %v452
    %v738 = vunpack.c.l.b16 %v453
    %v739 = vunpack.c.h.b16 %v453
    %v740 = vunpack.c.l.b16 %v454
    %v741 = vunpack.c.h.b16 %v454
    %v742 = vunpack.c.l.b16 %v455
    %v743 = vunpack.c.h.b16 %v455
    %v744 = vunpack.c.l.b16 %v456
    %v745 = vunpack.c.h.b16 %v456
    %v746 = vunpack.c.l.b16 %v457
    %v747 = vunpack.c.h.b16 %v457
    %v748 = vunpack.c.l.b16 %v458
    %v749 = vunpack.c.h.b16 %v458
    %v750 = vunpack.c.l.b16 %v459
    %v751 = vunpack.c.h.b16 %v459
    %v752 = vunpack.c.l.b16 %v460
    %v753 = vunpack.c.h.b16 %v460
    %v754 = vunpack.c.l.b16 %v461
    %v755 = vunpack.c.h.b16 %v461
    %v756 = vunpack.c.l.b16 %v462
    %v757 = vunpack.c.h.b16 %v462
    %v758 = vunpack.c.l.b16 %v463
    %v759 = vunpack.c.h.b16 %v463
    %v760 = vunpack.c.l.b16 %v464
    %v761 = vunpack.c.h.b16 %v464
    %v762 = vunpack.c.l.b16 %v465
    %v763 = vunpack.c.h.b16 %v465
    %v764 = vunpack.c.l.b16 %v466
    %v765 = vunpack.c.h.b16 %v466
    %v766 = vunpack.c.l.b16 %v467
    %v767 = vunpack.c.h.b16 %v467
    %v768 = vpack.c.b16 %v574, %v572
    %v769 = vpack.c.b16 %v575, %v573
    %v770 = vpack.c.b16 %v578, %v576
    %v771 = vpack.c.b16 %v579, %v577
    %v772 = vpack.c.b16 %v582, %v580
    %v773 = vpack.c.b16 %v583, %v581
    %v774 = vpack.c.b16 %v586, %v584
    %v775 = vpack.c.b16 %v587, %v585
    %v776 = vpack.c.b16 %v590, %v588
    %v777 = vpack.c.b16 %v591, %v589
    %v778 = vpack.c.b16 %v594, %v592
    %v779 = vpack.c.b16 %v595, %v593
    %v780 = vpack.c.b16 %v598, %v596
    %v781 = vpack.c.b16 %v599, %v597
    %v782 = vpack.c.b16 %v602, %v600
    %v783 = vpack.c.b16 %v603, %v601
    %v784 = vpack.c.b16 %v606, %v604
    %v785 = vpack.c.b16 %v607, %v605
    %v786 = vpack.c.b16 %v610, %v608
    %v787 = vpack.c.b16 %v611, %v609
    %v788 = vpack.c.b16 %v614, %v612
    %v789 = vpack.c.b16 %v615, %v613
    %v790 = vpack.c.b16 %v618, %v616
    %v791 = vpack.c.b16 %v619, %v617
    %v792 = vpack.c.b16 %v622, %v620
    %v793 = vpack.c.b16 %v623, %v621
    %v794 = vpack.c.b16 %v626, %v624
    %v795 = vpack.c.b16 %v627, %v625
    %v796 = vpack.c.b16 %v630, %v628
    %v797 = vpack.c.b16 %v631, %v629
    %v798 = vpack.c.b16 %v634, %v632
    %v799 = vpack.c.b16 %v635, %v633
    %v800 = vpack.c.b16 %v638, %v636
    %v801 = vpack.c.b16 %v639, %v637
    %v802 = vpack.c.b16 %v642, %v640
    %v803 = vpack.c.b16 %v643, %v641
    %v804 = vpack.c.b16 %v646, %v644
    %v805 = vpack.c.b16 %v647, %v645
    %v806 = vpack.c.b16 %v650, %v648
    %v807 = vpack.c.b16 %v651, %v649
    %v808 = vpack.c.b16 %v654, %v652
    %v809 = vpack.c.b16 %v655, %v653
    %v810 = vpack.c.b16 %v658, %v656
    %v811 = vpack.c.b16 %v659, %v657
    %v812 = vpack.c.b16 %v662, %v660
    %v813 = vpack.c.b16 %v663, %v661
    %v814 = vpack.c.b16 %v666, %v664
    %v815 = vpack.c.b16 %v667, %v665
    %v816 = vpack.c.b16 %v670, %v668
    %v817 = vpack.c.b16 %v671, %v669
    %v818 = vpack.c.b16 %v674, %v672
    %v819 = vpack.c.b16 %v675, %v673
    %v820 = vpack.c.b16 %v678, %v676
    %v821 = vpack.c.b16 %v679, %v677
    %v822 = vpack.c.b16 %v682, %v680
    %v823 = vpack.c.b16 %v683, %v681
    %v824 = vpack.c.b16 %v686, %v684
    %v825 = vpack.c.b16 %v687, %v685
    %v826 = vpack.c.b16 %v690, %v688
    %v827 = vpack.c.b16 %v691, %v689
    %v828 = vpack.c.b16 %v694, %v692
    %v829 = vpack.c.b16 %v695, %v693
    %v830 = vpack.c.b16 %v698, %v696
    %v831 = vpack.c.b16 %v699, %v697
    %v832 = vpack.c.b16 %v702, %v700
    %v833 = vpack.c.b16 %v703, %v701
    %v834 = vpack.c.b16 %v706, %v704
    %v835 = vpack.c.b16 %v707, %v705
    %v836 = vpack.c.b16 %v710, %v708
    %v837 = vpack.c.b16 %v711, %v709
    %v838 = vpack.c.b16 %v714, %v712
    %v839 = vpack.c.b16 %v715, %v713
    %v840 = vpack.c.b16 %v718, %v716
    %v841 = vpack.c.b16 %v719, %v717
    %v842 = vpack.c.b16 %v722, %v720
    %v843 = vpack.c.b16 %v723, %v721
    %v844 = vpack.c.b16 %v726, %v724
    %v845 = vpack.c.b16 %v727, %v725
    %v846 = vpack.c.b16 %v730, %v728
    %v847 = vpack.c.b16 %v731, %v729
    %v848 = vpack.c.b16 %v734, %v732
    %v849 = vpack.c.b16 %v735, %v733
    %v850 = vpack.c.b16 %v738, %v736
    %v851 = vpack.c.b16 %v739, %v737
    %v852 = vpack.c.b16 %v742, %v740
    %v853 = vpack.c.b16 %v743, %v741
    %v854 = vpack.c.b16 %v746, %v744
    %v855 = vpack.c.b16 %v747, %v745
    %v856 = vpack.c.b16 %v750, %v748
    %v857 = vpack.c.b16 %v751, %v749
    %v858 = vpack.c.b16 %v754, %v752
    %v859 = vpack.c.b16 %v755, %v753
    %v860 = vpack.c.b16 %v758, %v756
    %v861 = vpack.c.b16 %v759, %v757
    %v862 = vpack.c.b16 %v762, %v760
    %v863 = vpack.c.b16 %v763, %v761
    %v864 = vpack.c.b16 %v766, %v764
    %v865 = vpack.c.b16 %v767, %v765
    %vm964 = vcmask 130048
    %v966 = vsel %vm964, %v285, 0
    %v969 = vsel %vm964, %v292, 0
    %v972 = vsel %vm964, %v299, 0
    %v975 = vsel %vm964, %v306, 0
    %v978 = vsel %vm964, %v313, 0
    %v981 = vsel %vm964, %v320, 0
    %v984 = vsel %vm964, %v327, 0
    %v987 = vsel %vm964, %v334, 0
    %v990 = vsel %vm964, %v341, 0
    %v993 = vsel %vm964, %v348, 0
    %v996 = vsel %vm964, %v355, 0
    %v999 = vsel %vm964, %v362, 0
    %v1002 = vsel %vm964, %v369, 0
    %1004 = vmatpush.bf16.msra.mxu0 %v782
    %1005 = vmatpush.bf16.msra.mxu0 %v780
    %1006 = vmatpush.bf16.msra.mxu0 %v778
    %1007 = vmatpush.bf16.msra.mxu0 %v776
    %1008 = vmatpush.bf16.msra.mxu0 %v774
    %1009 = vmatpush.bf16.msra.mxu0 %v772
    %1010 = vmatpush.bf16.msra.mxu0 %v770
    %1011 = vmatpush.bf16.msra.mxu0 %v768
    %1012 = vmatmul.bf16.gmra.mxu0 %v279
    %v1013 = vpop.f32.mrf.mxu0
    %v1014 = vadd.f32 %v470, %v1013
    %v1015 = vpop.f32.mrf.mxu0
    %v1016 = vadd.f32 %v470, %v1015
    %1017 = vmatmul.bf16.gmra.mxu0 %v286
    %v1018 = vpop.f32.mrf.mxu0
    %v1019 = vadd.f32 %v470, %v1018
    %v1020 = vpop.f32.mrf.mxu0
    %v1021 = vadd.f32 %v470, %v1020
    %1022 = vmatmul.bf16.gmra.mxu0 %v293
    %v1023 = vpop.f32.mrf.mxu0
    %v1024 = vadd.f32 %v470, %v1023
    %v1025 = vpop.f32.mrf.mxu0
    %v1026 = vadd.f32 %v470, %v1025
    %1027 = vmatmul.bf16.gmra.mxu0 %v300
    %v1028 = vpop.f32.mrf.mxu0
    %v1029 = vadd.f32 %v470, %v1028
    %v1030 = vpop.f32.mrf.mxu0
    %v1031 = vadd.f32 %v470, %v1030
    %1032 = vmatmul.bf16.gmra.mxu0 %v307
    %v1033 = vpop.f32.mrf.mxu0
    %v1034 = vadd.f32 %v470, %v1033
    %v1035 = vpop.f32.mrf.mxu0
    %v1036 = vadd.f32 %v470, %v1035
    %1037 = vmatmul.bf16.gmra.mxu0 %v314
    %v1038 = vpop.f32.mrf.mxu0
    %v1039 = vadd.f32 %v470, %v1038
    %v1040 = vpop.f32.mrf.mxu0
    %v1041 = vadd.f32 %v470, %v1040
    %1042 = vmatmul.bf16.gmra.mxu0 %v321
    %v1043 = vpop.f32.mrf.mxu0
    %v1044 = vadd.f32 %v470, %v1043
    %v1045 = vpop.f32.mrf.mxu0
    %v1046 = vadd.f32 %v470, %v1045
    %1047 = vmatmul.bf16.gmra.mxu0 %v328
    %v1048 = vpop.f32.mrf.mxu0
    %v1049 = vadd.f32 %v470, %v1048
    %v1050 = vpop.f32.mrf.mxu0
    %v1051 = vadd.f32 %v470, %v1050
    %1052 = vmatmul.bf16.gmra.mxu0 %v335
    %v1053 = vpop.f32.mrf.mxu0
    %v1054 = vadd.f32 %v470, %v1053
    %v1055 = vpop.f32.mrf.mxu0
    %v1056 = vadd.f32 %v470, %v1055
    %1057 = vmatmul.bf16.gmra.mxu0 %v342
    %v1058 = vpop.f32.mrf.mxu0
    %v1059 = vadd.f32 %v470, %v1058
    %v1060 = vpop.f32.mrf.mxu0
    %v1061 = vadd.f32 %v470, %v1060
    %1062 = vmatmul.bf16.gmra.mxu0 %v349
    %v1063 = vpop.f32.mrf.mxu0
    %v1064 = vadd.f32 %v470, %v1063
    %v1065 = vpop.f32.mrf.mxu0
    %v1066 = vadd.f32 %v470, %v1065
    %1067 = vmatmul.bf16.gmra.mxu0 %v356
    %v1068 = vpop.f32.mrf.mxu0
    %v1069 = vadd.f32 %v470, %v1068
    %v1070 = vpop.f32.mrf.mxu0
    %v1071 = vadd.f32 %v470, %v1070
    %1072 = vmatmul.bf16.gmra.mxu0 %v363
    %v1073 = vpop.f32.mrf.mxu0
    %v1074 = vadd.f32 %v470, %v1073
    %v1075 = vpop.f32.mrf.mxu0
    %1076 = vdwg.mxu0
    %1077 = vmatpush.bf16.msra.mxu0 %v798
    %1078 = vmatpush.bf16.msra.mxu0 %v796
    %1079 = vmatpush.bf16.msra.mxu0 %v794
    %1080 = vmatpush.bf16.msra.mxu0 %v792
    %1081 = vmatpush.bf16.msra.mxu0 %v790
    %1082 = vmatpush.bf16.msra.mxu0 %v788
    %1083 = vmatpush.bf16.msra.mxu0 %v786
    %1084 = vmatpush.bf16.msra.mxu0 %v784
    %1085 = vmatmul.bf16.gmra.mxu0 %v280
    %v1086 = vpop.f32.mrf.mxu0
    %v1087 = vadd.f32 %v1014, %v1086
    %v1088 = vpop.f32.mrf.mxu0
    %v1089 = vadd.f32 %v1016, %v1088
    %1090 = vmatmul.bf16.gmra.mxu0 %v287
    %v1091 = vpop.f32.mrf.mxu0
    %v1092 = vadd.f32 %v1019, %v1091
    %v1093 = vpop.f32.mrf.mxu0
    %v1094 = vadd.f32 %v1021, %v1093
    %1095 = vmatmul.bf16.gmra.mxu0 %v294
    %v1096 = vpop.f32.mrf.mxu0
    %v1097 = vadd.f32 %v1024, %v1096
    %v1098 = vpop.f32.mrf.mxu0
    %v1099 = vadd.f32 %v1026, %v1098
    %1100 = vmatmul.bf16.gmra.mxu0 %v301
    %v1101 = vpop.f32.mrf.mxu0
    %v1102 = vadd.f32 %v1029, %v1101
    %v1103 = vpop.f32.mrf.mxu0
    %v1104 = vadd.f32 %v1031, %v1103
    %1105 = vmatmul.bf16.gmra.mxu0 %v308
    %v1106 = vpop.f32.mrf.mxu0
    %v1107 = vadd.f32 %v1034, %v1106
    %v1108 = vpop.f32.mrf.mxu0
    %v1109 = vadd.f32 %v1036, %v1108
    %1110 = vmatmul.bf16.gmra.mxu0 %v315
    %v1111 = vpop.f32.mrf.mxu0
    %v1112 = vadd.f32 %v1039, %v1111
    %v1113 = vpop.f32.mrf.mxu0
    %v1114 = vadd.f32 %v1041, %v1113
    %1115 = vmatmul.bf16.gmra.mxu0 %v322
    %v1116 = vpop.f32.mrf.mxu0
    %v1117 = vadd.f32 %v1044, %v1116
    %v1118 = vpop.f32.mrf.mxu0
    %v1119 = vadd.f32 %v1046, %v1118
    %1120 = vmatmul.bf16.gmra.mxu0 %v329
    %v1121 = vpop.f32.mrf.mxu0
    %v1122 = vadd.f32 %v1049, %v1121
    %v1123 = vpop.f32.mrf.mxu0
    %v1124 = vadd.f32 %v1051, %v1123
    %1125 = vmatmul.bf16.gmra.mxu0 %v336
    %v1126 = vpop.f32.mrf.mxu0
    %v1127 = vadd.f32 %v1054, %v1126
    %v1128 = vpop.f32.mrf.mxu0
    %v1129 = vadd.f32 %v1056, %v1128
    %1130 = vmatmul.bf16.gmra.mxu0 %v343
    %v1131 = vpop.f32.mrf.mxu0
    %v1132 = vadd.f32 %v1059, %v1131
    %v1133 = vpop.f32.mrf.mxu0
    %v1134 = vadd.f32 %v1061, %v1133
    %1135 = vmatmul.bf16.gmra.mxu0 %v350
    %v1136 = vpop.f32.mrf.mxu0
    %v1137 = vadd.f32 %v1064, %v1136
    %v1138 = vpop.f32.mrf.mxu0
    %v1139 = vadd.f32 %v1066, %v1138
    %1140 = vmatmul.bf16.gmra.mxu0 %v357
    %v1141 = vpop.f32.mrf.mxu0
    %v1142 = vadd.f32 %v1069, %v1141
    %v1143 = vpop.f32.mrf.mxu0
    %v1144 = vadd.f32 %v1071, %v1143
    %1145 = vmatmul.bf16.gmra.mxu0 %v364
    %v1146 = vpop.f32.mrf.mxu0
    %v1147 = vadd.f32 %v1074, %v1146
    %v1148 = vpop.f32.mrf.mxu0
    %1149 = vdwg.mxu0
    %1150 = vmatpush.bf16.msra.mxu0 %v814
    %1151 = vmatpush.bf16.msra.mxu0 %v812
    %1152 = vmatpush.bf16.msra.mxu0 %v810
    %1153 = vmatpush.bf16.msra.mxu0 %v808
    %1154 = vmatpush.bf16.msra.mxu0 %v806
    %1155 = vmatpush.bf16.msra.mxu0 %v804
    %1156 = vmatpush.bf16.msra.mxu0 %v802
    %1157 = vmatpush.bf16.msra.mxu0 %v800
    %1158 = vmatmul.bf16.gmra.mxu0 %v281
    %v1159 = vpop.f32.mrf.mxu0
    %v1160 = vadd.f32 %v1087, %v1159
    %v1161 = vpop.f32.mrf.mxu0
    %v1162 = vadd.f32 %v1089, %v1161
    %1163 = vmatmul.bf16.gmra.mxu0 %v288
    %v1164 = vpop.f32.mrf.mxu0
    %v1165 = vadd.f32 %v1092, %v1164
    %v1166 = vpop.f32.mrf.mxu0
    %v1167 = vadd.f32 %v1094, %v1166
    %1168 = vmatmul.bf16.gmra.mxu0 %v295
    %v1169 = vpop.f32.mrf.mxu0
    %v1170 = vadd.f32 %v1097, %v1169
    %v1171 = vpop.f32.mrf.mxu0
    %v1172 = vadd.f32 %v1099, %v1171
    %1173 = vmatmul.bf16.gmra.mxu0 %v302
    %v1174 = vpop.f32.mrf.mxu0
    %v1175 = vadd.f32 %v1102, %v1174
    %v1176 = vpop.f32.mrf.mxu0
    %v1177 = vadd.f32 %v1104, %v1176
    %1178 = vmatmul.bf16.gmra.mxu0 %v309
    %v1179 = vpop.f32.mrf.mxu0
    %v1180 = vadd.f32 %v1107, %v1179
    %v1181 = vpop.f32.mrf.mxu0
    %v1182 = vadd.f32 %v1109, %v1181
    %1183 = vmatmul.bf16.gmra.mxu0 %v316
    %v1184 = vpop.f32.mrf.mxu0
    %v1185 = vadd.f32 %v1112, %v1184
    %v1186 = vpop.f32.mrf.mxu0
    %v1187 = vadd.f32 %v1114, %v1186
    %1188 = vmatmul.bf16.gmra.mxu0 %v323
    %v1189 = vpop.f32.mrf.mxu0
    %v1190 = vadd.f32 %v1117, %v1189
    %v1191 = vpop.f32.mrf.mxu0
    %v1192 = vadd.f32 %v1119, %v1191
    %1193 = vmatmul.bf16.gmra.mxu0 %v330
    %v1194 = vpop.f32.mrf.mxu0
    %v1195 = vadd.f32 %v1122, %v1194
    %v1196 = vpop.f32.mrf.mxu0
    %v1197 = vadd.f32 %v1124, %v1196
    %1198 = vmatmul.bf16.gmra.mxu0 %v337
    %v1199 = vpop.f32.mrf.mxu0
    %v1200 = vadd.f32 %v1127, %v1199
    %v1201 = vpop.f32.mrf.mxu0
    %v1202 = vadd.f32 %v1129, %v1201
    %1203 = vmatmul.bf16.gmra.mxu0 %v344
    %v1204 = vpop.f32.mrf.mxu0
    %v1205 = vadd.f32 %v1132, %v1204
    %v1206 = vpop.f32.mrf.mxu0
    %v1207 = vadd.f32 %v1134, %v1206
    %1208 = vmatmul.bf16.gmra.mxu0 %v351
    %v1209 = vpop.f32.mrf.mxu0
    %v1210 = vadd.f32 %v1137, %v1209
    %v1211 = vpop.f32.mrf.mxu0
    %v1212 = vadd.f32 %v1139, %v1211
    %1213 = vmatmul.bf16.gmra.mxu0 %v358
    %v1214 = vpop.f32.mrf.mxu0
    %v1215 = vadd.f32 %v1142, %v1214
    %v1216 = vpop.f32.mrf.mxu0
    %v1217 = vadd.f32 %v1144, %v1216
    %1218 = vmatmul.bf16.gmra.mxu0 %v365
    %v1219 = vpop.f32.mrf.mxu0
    %v1220 = vadd.f32 %v1147, %v1219
    %v1221 = vpop.f32.mrf.mxu0
    %1222 = vdwg.mxu0
    %1223 = vmatpush.bf16.msra.mxu0 %v830
    %1224 = vmatpush.bf16.msra.mxu0 %v828
    %1225 = vmatpush.bf16.msra.mxu0 %v826
    %1226 = vmatpush.bf16.msra.mxu0 %v824
    %1227 = vmatpush.bf16.msra.mxu0 %v822
    %1228 = vmatpush.bf16.msra.mxu0 %v820
    %1229 = vmatpush.bf16.msra.mxu0 %v818
    %1230 = vmatpush.bf16.msra.mxu0 %v816
    %1231 = vmatmul.bf16.gmra.mxu0 %v282
    %v1232 = vpop.f32.mrf.mxu0
    %v1233 = vadd.f32 %v1160, %v1232
    %v1234 = vpop.f32.mrf.mxu0
    %v1235 = vadd.f32 %v1162, %v1234
    %1236 = vmatmul.bf16.gmra.mxu0 %v289
    %v1237 = vpop.f32.mrf.mxu0
    %v1238 = vadd.f32 %v1165, %v1237
    %v1239 = vpop.f32.mrf.mxu0
    %v1240 = vadd.f32 %v1167, %v1239
    %1241 = vmatmul.bf16.gmra.mxu0 %v296
    %v1242 = vpop.f32.mrf.mxu0
    %v1243 = vadd.f32 %v1170, %v1242
    %v1244 = vpop.f32.mrf.mxu0
    %v1245 = vadd.f32 %v1172, %v1244
    %1246 = vmatmul.bf16.gmra.mxu0 %v303
    %v1247 = vpop.f32.mrf.mxu0
    %v1248 = vadd.f32 %v1175, %v1247
    %v1249 = vpop.f32.mrf.mxu0
    %v1250 = vadd.f32 %v1177, %v1249
    %1251 = vmatmul.bf16.gmra.mxu0 %v310
    %v1252 = vpop.f32.mrf.mxu0
    %v1253 = vadd.f32 %v1180, %v1252
    %v1254 = vpop.f32.mrf.mxu0
    %v1255 = vadd.f32 %v1182, %v1254
    %1256 = vmatmul.bf16.gmra.mxu0 %v317
    %v1257 = vpop.f32.mrf.mxu0
    %v1258 = vadd.f32 %v1185, %v1257
    %v1259 = vpop.f32.mrf.mxu0
    %v1260 = vadd.f32 %v1187, %v1259
    %1261 = vmatmul.bf16.gmra.mxu0 %v324
    %v1262 = vpop.f32.mrf.mxu0
    %v1263 = vadd.f32 %v1190, %v1262
    %v1264 = vpop.f32.mrf.mxu0
    %v1265 = vadd.f32 %v1192, %v1264
    %1266 = vmatmul.bf16.gmra.mxu0 %v331
    %v1267 = vpop.f32.mrf.mxu0
    %v1268 = vadd.f32 %v1195, %v1267
    %v1269 = vpop.f32.mrf.mxu0
    %v1270 = vadd.f32 %v1197, %v1269
    %1271 = vmatmul.bf16.gmra.mxu0 %v338
    %v1272 = vpop.f32.mrf.mxu0
    %v1273 = vadd.f32 %v1200, %v1272
    %v1274 = vpop.f32.mrf.mxu0
    %v1275 = vadd.f32 %v1202, %v1274
    %1276 = vmatmul.bf16.gmra.mxu0 %v345
    %v1277 = vpop.f32.mrf.mxu0
    %v1278 = vadd.f32 %v1205, %v1277
    %v1279 = vpop.f32.mrf.mxu0
    %v1280 = vadd.f32 %v1207, %v1279
    %1281 = vmatmul.bf16.gmra.mxu0 %v352
    %v1282 = vpop.f32.mrf.mxu0
    %v1283 = vadd.f32 %v1210, %v1282
    %v1284 = vpop.f32.mrf.mxu0
    %v1285 = vadd.f32 %v1212, %v1284
    %1286 = vmatmul.bf16.gmra.mxu0 %v359
    %v1287 = vpop.f32.mrf.mxu0
    %v1288 = vadd.f32 %v1215, %v1287
    %v1289 = vpop.f32.mrf.mxu0
    %v1290 = vadd.f32 %v1217, %v1289
    %1291 = vmatmul.bf16.gmra.mxu0 %v366
    %v1292 = vpop.f32.mrf.mxu0
    %v1293 = vadd.f32 %v1220, %v1292
    %v1294 = vpop.f32.mrf.mxu0
    %1295 = vdwg.mxu0
    %1296 = vmatpush.bf16.msra.mxu0 %v846
    %1297 = vmatpush.bf16.msra.mxu0 %v844
    %1298 = vmatpush.bf16.msra.mxu0 %v842
    %1299 = vmatpush.bf16.msra.mxu0 %v840
    %1300 = vmatpush.bf16.msra.mxu0 %v838
    %1301 = vmatpush.bf16.msra.mxu0 %v836
    %1302 = vmatpush.bf16.msra.mxu0 %v834
    %1303 = vmatpush.bf16.msra.mxu0 %v832
    %1304 = vmatmul.bf16.gmra.mxu0 %v283
    %v1305 = vpop.f32.mrf.mxu0
    %v1306 = vadd.f32 %v1233, %v1305
    %v1307 = vpop.f32.mrf.mxu0
    %v1308 = vadd.f32 %v1235, %v1307
    %1309 = vmatmul.bf16.gmra.mxu0 %v290
    %v1310 = vpop.f32.mrf.mxu0
    %v1311 = vadd.f32 %v1238, %v1310
    %v1312 = vpop.f32.mrf.mxu0
    %v1313 = vadd.f32 %v1240, %v1312
    %1314 = vmatmul.bf16.gmra.mxu0 %v297
    %v1315 = vpop.f32.mrf.mxu0
    %v1316 = vadd.f32 %v1243, %v1315
    %v1317 = vpop.f32.mrf.mxu0
    %v1318 = vadd.f32 %v1245, %v1317
    %1319 = vmatmul.bf16.gmra.mxu0 %v304
    %v1320 = vpop.f32.mrf.mxu0
    %v1321 = vadd.f32 %v1248, %v1320
    %v1322 = vpop.f32.mrf.mxu0
    %v1323 = vadd.f32 %v1250, %v1322
    %1324 = vmatmul.bf16.gmra.mxu0 %v311
    %v1325 = vpop.f32.mrf.mxu0
    %v1326 = vadd.f32 %v1253, %v1325
    %v1327 = vpop.f32.mrf.mxu0
    %v1328 = vadd.f32 %v1255, %v1327
    %1329 = vmatmul.bf16.gmra.mxu0 %v318
    %v1330 = vpop.f32.mrf.mxu0
    %v1331 = vadd.f32 %v1258, %v1330
    %v1332 = vpop.f32.mrf.mxu0
    %v1333 = vadd.f32 %v1260, %v1332
    %1334 = vmatmul.bf16.gmra.mxu0 %v325
    %v1335 = vpop.f32.mrf.mxu0
    %v1336 = vadd.f32 %v1263, %v1335
    %v1337 = vpop.f32.mrf.mxu0
    %v1338 = vadd.f32 %v1265, %v1337
    %1339 = vmatmul.bf16.gmra.mxu0 %v332
    %v1340 = vpop.f32.mrf.mxu0
    %v1341 = vadd.f32 %v1268, %v1340
    %v1342 = vpop.f32.mrf.mxu0
    %v1343 = vadd.f32 %v1270, %v1342
    %1344 = vmatmul.bf16.gmra.mxu0 %v339
    %v1345 = vpop.f32.mrf.mxu0
    %v1346 = vadd.f32 %v1273, %v1345
    %v1347 = vpop.f32.mrf.mxu0
    %v1348 = vadd.f32 %v1275, %v1347
    %1349 = vmatmul.bf16.gmra.mxu0 %v346
    %v1350 = vpop.f32.mrf.mxu0
    %v1351 = vadd.f32 %v1278, %v1350
    %v1352 = vpop.f32.mrf.mxu0
    %v1353 = vadd.f32 %v1280, %v1352
    %1354 = vmatmul.bf16.gmra.mxu0 %v353
    %v1355 = vpop.f32.mrf.mxu0
    %v1356 = vadd.f32 %v1283, %v1355
    %v1357 = vpop.f32.mrf.mxu0
    %v1358 = vadd.f32 %v1285, %v1357
    %1359 = vmatmul.bf16.gmra.mxu0 %v360
    %v1360 = vpop.f32.mrf.mxu0
    %v1361 = vadd.f32 %v1288, %v1360
    %v1362 = vpop.f32.mrf.mxu0
    %v1363 = vadd.f32 %v1290, %v1362
    %1364 = vmatmul.bf16.gmra.mxu0 %v367
    %v1365 = vpop.f32.mrf.mxu0
    %v1366 = vadd.f32 %v1293, %v1365
    %v1367 = vpop.f32.mrf.mxu0
    %1368 = vdwg.mxu0
    %1369 = vmatpush.bf16.msra.mxu0 %v862
    %1370 = vmatpush.bf16.msra.mxu0 %v860
    %1371 = vmatpush.bf16.msra.mxu0 %v858
    %1372 = vmatpush.bf16.msra.mxu0 %v856
    %1373 = vmatpush.bf16.msra.mxu0 %v854
    %1374 = vmatpush.bf16.msra.mxu0 %v852
    %1375 = vmatpush.bf16.msra.mxu0 %v850
    %1376 = vmatpush.bf16.msra.mxu0 %v848
    %1377 = vmatmul.bf16.gmra.mxu0 %v284
    %v1378 = vpop.f32.mrf.mxu0
    %v1379 = vadd.f32 %v1306, %v1378
    %v1380 = vpop.f32.mrf.mxu0
    %v1381 = vadd.f32 %v1308, %v1380
    %1382 = vmatmul.bf16.gmra.mxu0 %v291
    %v1383 = vpop.f32.mrf.mxu0
    %v1384 = vadd.f32 %v1311, %v1383
    %v1385 = vpop.f32.mrf.mxu0
    %v1386 = vadd.f32 %v1313, %v1385
    %1387 = vmatmul.bf16.gmra.mxu0 %v298
    %v1388 = vpop.f32.mrf.mxu0
    %v1389 = vadd.f32 %v1316, %v1388
    %v1390 = vpop.f32.mrf.mxu0
    %v1391 = vadd.f32 %v1318, %v1390
    %1392 = vmatmul.bf16.gmra.mxu0 %v305
    %v1393 = vpop.f32.mrf.mxu0
    %v1394 = vadd.f32 %v1321, %v1393
    %v1395 = vpop.f32.mrf.mxu0
    %v1396 = vadd.f32 %v1323, %v1395
    %1397 = vmatmul.bf16.gmra.mxu0 %v312
    %v1398 = vpop.f32.mrf.mxu0
    %v1399 = vadd.f32 %v1326, %v1398
    %v1400 = vpop.f32.mrf.mxu0
    %v1401 = vadd.f32 %v1328, %v1400
    %1402 = vmatmul.bf16.gmra.mxu0 %v319
    %v1403 = vpop.f32.mrf.mxu0
    %v1404 = vadd.f32 %v1331, %v1403
    %v1405 = vpop.f32.mrf.mxu0
    %v1406 = vadd.f32 %v1333, %v1405
    %1407 = vmatmul.bf16.gmra.mxu0 %v326
    %v1408 = vpop.f32.mrf.mxu0
    %v1409 = vadd.f32 %v1336, %v1408
    %v1410 = vpop.f32.mrf.mxu0
    %v1411 = vadd.f32 %v1338, %v1410
    %1412 = vmatmul.bf16.gmra.mxu0 %v333
    %v1413 = vpop.f32.mrf.mxu0
    %v1414 = vadd.f32 %v1341, %v1413
    %v1415 = vpop.f32.mrf.mxu0
    %v1416 = vadd.f32 %v1343, %v1415
    %1417 = vmatmul.bf16.gmra.mxu0 %v340
    %v1418 = vpop.f32.mrf.mxu0
    %v1419 = vadd.f32 %v1346, %v1418
    %v1420 = vpop.f32.mrf.mxu0
    %v1421 = vadd.f32 %v1348, %v1420
    %1422 = vmatmul.bf16.gmra.mxu0 %v347
    %v1423 = vpop.f32.mrf.mxu0
    %v1424 = vadd.f32 %v1351, %v1423
    %v1425 = vpop.f32.mrf.mxu0
    %v1426 = vadd.f32 %v1353, %v1425
    %1427 = vmatmul.bf16.gmra.mxu0 %v354
    %v1428 = vpop.f32.mrf.mxu0
    %v1429 = vadd.f32 %v1356, %v1428
    %v1430 = vpop.f32.mrf.mxu0
    %v1431 = vadd.f32 %v1358, %v1430
    %1432 = vmatmul.bf16.gmra.mxu0 %v361
    %v1433 = vpop.f32.mrf.mxu0
    %v1434 = vadd.f32 %v1361, %v1433
    %v1435 = vpop.f32.mrf.mxu0
    %v1436 = vadd.f32 %v1363, %v1435
    %1437 = vmatmul.bf16.gmra.mxu0 %v368
    %v1438 = vpop.f32.mrf.mxu0
    %v1439 = vadd.f32 %v1366, %v1438
    %v1440 = vpop.f32.mrf.mxu0
    %1441 = vdwg.mxu0
    %1442 = vmatpush.bf16.msra.mxu0 0
    %1443 = vmatpush.bf16.msra.mxu0 0
    %1444 = vmatpush.bf16.msra.mxu0 0
    %1445 = vmatpush.bf16.msra.mxu0 0
    %1446 = vmatpush.bf16.msra.mxu0 0
    %1447 = vmatpush.bf16.msra.mxu0 0
    %1448 = vmatpush.bf16.msra.mxu0 0
    %1449 = vmatpush.bf16.msra.mxu0 %v864
    %1450 = vmatmul.bf16.gmra.mxu0 %v966
    %v1451 = vpop.f32.mrf.mxu0
    %v1452 = vadd.f32 %v1379, %v1451
    %v1453 = vpop.f32.mrf.mxu0
    %v1454 = vadd.f32 %v1381, %v1453
    %1455 = vmatmul.bf16.gmra.mxu0 %v969
    %v1456 = vpop.f32.mrf.mxu0
    %v1457 = vadd.f32 %v1384, %v1456
    %v1458 = vpop.f32.mrf.mxu0
    %v1459 = vadd.f32 %v1386, %v1458
    %1460 = vmatmul.bf16.gmra.mxu0 %v972
    %v1461 = vpop.f32.mrf.mxu0
    %v1462 = vadd.f32 %v1389, %v1461
    %v1463 = vpop.f32.mrf.mxu0
    %v1464 = vadd.f32 %v1391, %v1463
    %1465 = vmatmul.bf16.gmra.mxu0 %v975
    %v1466 = vpop.f32.mrf.mxu0
    %v1467 = vadd.f32 %v1394, %v1466
    %v1468 = vpop.f32.mrf.mxu0
    %v1469 = vadd.f32 %v1396, %v1468
    %1470 = vmatmul.bf16.gmra.mxu0 %v978
    %v1471 = vpop.f32.mrf.mxu0
    %v1472 = vadd.f32 %v1399, %v1471
    %v1473 = vpop.f32.mrf.mxu0
    %v1474 = vadd.f32 %v1401, %v1473
    %1475 = vmatmul.bf16.gmra.mxu0 %v981
    %v1476 = vpop.f32.mrf.mxu0
    %v1477 = vadd.f32 %v1404, %v1476
    %v1478 = vpop.f32.mrf.mxu0
    %v1479 = vadd.f32 %v1406, %v1478
    %1480 = vmatmul.bf16.gmra.mxu0 %v984
    %v1481 = vpop.f32.mrf.mxu0
    %v1482 = vadd.f32 %v1409, %v1481
    %v1483 = vpop.f32.mrf.mxu0
    %v1484 = vadd.f32 %v1411, %v1483
    %1485 = vmatmul.bf16.gmra.mxu0 %v987
    %v1486 = vpop.f32.mrf.mxu0
    %v1487 = vadd.f32 %v1414, %v1486
    %v1488 = vpop.f32.mrf.mxu0
    %v1489 = vadd.f32 %v1416, %v1488
    %1490 = vmatmul.bf16.gmra.mxu0 %v990
    %v1491 = vpop.f32.mrf.mxu0
    %v1492 = vadd.f32 %v1419, %v1491
    %v1493 = vpop.f32.mrf.mxu0
    %v1494 = vadd.f32 %v1421, %v1493
    %1495 = vmatmul.bf16.gmra.mxu0 %v993
    %v1496 = vpop.f32.mrf.mxu0
    %v1497 = vadd.f32 %v1424, %v1496
    %v1498 = vpop.f32.mrf.mxu0
    %v1499 = vadd.f32 %v1426, %v1498
    %1500 = vmatmul.bf16.gmra.mxu0 %v996
    %v1501 = vpop.f32.mrf.mxu0
    %v1502 = vadd.f32 %v1429, %v1501
    %v1503 = vpop.f32.mrf.mxu0
    %v1504 = vadd.f32 %v1431, %v1503
    %1505 = vmatmul.bf16.gmra.mxu0 %v999
    %v1506 = vpop.f32.mrf.mxu0
    %v1507 = vadd.f32 %v1434, %v1506
    %v1508 = vpop.f32.mrf.mxu0
    %v1509 = vadd.f32 %v1436, %v1508
    %1510 = vmatmul.bf16.gmra.mxu0 %v1002
    %v1511 = vpop.f32.mrf.mxu0
    %v1512 = vadd.f32 %v1439, %v1511
    %v1513 = vpop.f32.mrf.mxu0
    %1514 = vdwg.mxu0
    %1515 = vmatpush.bf16.msra.mxu0 %v783
    %1516 = vmatpush.bf16.msra.mxu0 %v781
    %1517 = vmatpush.bf16.msra.mxu0 %v779
    %1518 = vmatpush.bf16.msra.mxu0 %v777
    %1519 = vmatpush.bf16.msra.mxu0 %v775
    %1520 = vmatpush.bf16.msra.mxu0 %v773
    %1521 = vmatpush.bf16.msra.mxu0 %v771
    %1522 = vmatpush.bf16.msra.mxu0 %v769
    %1523 = vmatmul.bf16.gmra.mxu0 %v279
    %v1524 = vpop.f32.mrf.mxu0
    %v1525 = vadd.f32 %v471, %v1524
    %v1526 = vpop.f32.mrf.mxu0
    %v1527 = vadd.f32 %v471, %v1526
    %1528 = vmatmul.bf16.gmra.mxu0 %v286
    %v1529 = vpop.f32.mrf.mxu0
    %v1530 = vadd.f32 %v471, %v1529
    %v1531 = vpop.f32.mrf.mxu0
    %v1532 = vadd.f32 %v471, %v1531
    %1533 = vmatmul.bf16.gmra.mxu0 %v293
    %v1534 = vpop.f32.mrf.mxu0
    %v1535 = vadd.f32 %v471, %v1534
    %v1536 = vpop.f32.mrf.mxu0
    %v1537 = vadd.f32 %v471, %v1536
    %1538 = vmatmul.bf16.gmra.mxu0 %v300
    %v1539 = vpop.f32.mrf.mxu0
    %v1540 = vadd.f32 %v471, %v1539
    %v1541 = vpop.f32.mrf.mxu0
    %v1542 = vadd.f32 %v471, %v1541
    %1543 = vmatmul.bf16.gmra.mxu0 %v307
    %v1544 = vpop.f32.mrf.mxu0
    %v1545 = vadd.f32 %v471, %v1544
    %v1546 = vpop.f32.mrf.mxu0
    %v1547 = vadd.f32 %v471, %v1546
    %1548 = vmatmul.bf16.gmra.mxu0 %v314
    %v1549 = vpop.f32.mrf.mxu0
    %v1550 = vadd.f32 %v471, %v1549
    %v1551 = vpop.f32.mrf.mxu0
    %v1552 = vadd.f32 %v471, %v1551
    %1553 = vmatmul.bf16.gmra.mxu0 %v321
    %v1554 = vpop.f32.mrf.mxu0
    %v1555 = vadd.f32 %v471, %v1554
    %v1556 = vpop.f32.mrf.mxu0
    %v1557 = vadd.f32 %v471, %v1556
    %1558 = vmatmul.bf16.gmra.mxu0 %v328
    %v1559 = vpop.f32.mrf.mxu0
    %v1560 = vadd.f32 %v471, %v1559
    %v1561 = vpop.f32.mrf.mxu0
    %v1562 = vadd.f32 %v471, %v1561
    %1563 = vmatmul.bf16.gmra.mxu0 %v335
    %v1564 = vpop.f32.mrf.mxu0
    %v1565 = vadd.f32 %v471, %v1564
    %v1566 = vpop.f32.mrf.mxu0
    %v1567 = vadd.f32 %v471, %v1566
    %1568 = vmatmul.bf16.gmra.mxu0 %v342
    %v1569 = vpop.f32.mrf.mxu0
    %v1570 = vadd.f32 %v471, %v1569
    %v1571 = vpop.f32.mrf.mxu0
    %v1572 = vadd.f32 %v471, %v1571
    %1573 = vmatmul.bf16.gmra.mxu0 %v349
    %v1574 = vpop.f32.mrf.mxu0
    %v1575 = vadd.f32 %v471, %v1574
    %v1576 = vpop.f32.mrf.mxu0
    %v1577 = vadd.f32 %v471, %v1576
    %1578 = vmatmul.bf16.gmra.mxu0 %v356
    %v1579 = vpop.f32.mrf.mxu0
    %v1580 = vadd.f32 %v471, %v1579
    %v1581 = vpop.f32.mrf.mxu0
    %v1582 = vadd.f32 %v471, %v1581
    %1583 = vmatmul.bf16.gmra.mxu0 %v363
    %v1584 = vpop.f32.mrf.mxu0
    %v1585 = vadd.f32 %v471, %v1584
    %v1586 = vpop.f32.mrf.mxu0
    %1587 = vdwg.mxu0
    %1588 = vmatpush.bf16.msra.mxu0 %v799
    %1589 = vmatpush.bf16.msra.mxu0 %v797
    %1590 = vmatpush.bf16.msra.mxu0 %v795
    %1591 = vmatpush.bf16.msra.mxu0 %v793
    %1592 = vmatpush.bf16.msra.mxu0 %v791
    %1593 = vmatpush.bf16.msra.mxu0 %v789
    %1594 = vmatpush.bf16.msra.mxu0 %v787
    %1595 = vmatpush.bf16.msra.mxu0 %v785
    %1596 = vmatmul.bf16.gmra.mxu0 %v280
    %v1597 = vpop.f32.mrf.mxu0
    %v1598 = vadd.f32 %v1525, %v1597
    %v1599 = vpop.f32.mrf.mxu0
    %v1600 = vadd.f32 %v1527, %v1599
    %1601 = vmatmul.bf16.gmra.mxu0 %v287
    %v1602 = vpop.f32.mrf.mxu0
    %v1603 = vadd.f32 %v1530, %v1602
    %v1604 = vpop.f32.mrf.mxu0
    %v1605 = vadd.f32 %v1532, %v1604
    %1606 = vmatmul.bf16.gmra.mxu0 %v294
    %v1607 = vpop.f32.mrf.mxu0
    %v1608 = vadd.f32 %v1535, %v1607
    %v1609 = vpop.f32.mrf.mxu0
    %v1610 = vadd.f32 %v1537, %v1609
    %1611 = vmatmul.bf16.gmra.mxu0 %v301
    %v1612 = vpop.f32.mrf.mxu0
    %v1613 = vadd.f32 %v1540, %v1612
    %v1614 = vpop.f32.mrf.mxu0
    %v1615 = vadd.f32 %v1542, %v1614
    %1616 = vmatmul.bf16.gmra.mxu0 %v308
    %v1617 = vpop.f32.mrf.mxu0
    %v1618 = vadd.f32 %v1545, %v1617
    %v1619 = vpop.f32.mrf.mxu0
    %v1620 = vadd.f32 %v1547, %v1619
    %1621 = vmatmul.bf16.gmra.mxu0 %v315
    %v1622 = vpop.f32.mrf.mxu0
    %v1623 = vadd.f32 %v1550, %v1622
    %v1624 = vpop.f32.mrf.mxu0
    %v1625 = vadd.f32 %v1552, %v1624
    %1626 = vmatmul.bf16.gmra.mxu0 %v322
    %v1627 = vpop.f32.mrf.mxu0
    %v1628 = vadd.f32 %v1555, %v1627
    %v1629 = vpop.f32.mrf.mxu0
    %v1630 = vadd.f32 %v1557, %v1629
    %1631 = vmatmul.bf16.gmra.mxu0 %v329
    %v1632 = vpop.f32.mrf.mxu0
    %v1633 = vadd.f32 %v1560, %v1632
    %v1634 = vpop.f32.mrf.mxu0
    %v1635 = vadd.f32 %v1562, %v1634
    %1636 = vmatmul.bf16.gmra.mxu0 %v336
    %v1637 = vpop.f32.mrf.mxu0
    %v1638 = vadd.f32 %v1565, %v1637
    %v1639 = vpop.f32.mrf.mxu0
    %v1640 = vadd.f32 %v1567, %v1639
    %1641 = vmatmul.bf16.gmra.mxu0 %v343
    %v1642 = vpop.f32.mrf.mxu0
    %v1643 = vadd.f32 %v1570, %v1642
    %v1644 = vpop.f32.mrf.mxu0
    %v1645 = vadd.f32 %v1572, %v1644
    %1646 = vmatmul.bf16.gmra.mxu0 %v350
    %v1647 = vpop.f32.mrf.mxu0
    %v1648 = vadd.f32 %v1575, %v1647
    %v1649 = vpop.f32.mrf.mxu0
    %v1650 = vadd.f32 %v1577, %v1649
    %1651 = vmatmul.bf16.gmra.mxu0 %v357
    %v1652 = vpop.f32.mrf.mxu0
    %v1653 = vadd.f32 %v1580, %v1652
    %v1654 = vpop.f32.mrf.mxu0
    %v1655 = vadd.f32 %v1582, %v1654
    %1656 = vmatmul.bf16.gmra.mxu0 %v364
    %v1657 = vpop.f32.mrf.mxu0
    %v1658 = vadd.f32 %v1585, %v1657
    %v1659 = vpop.f32.mrf.mxu0
    %1660 = vdwg.mxu0
    %1661 = vmatpush.bf16.msra.mxu0 %v815
    %1662 = vmatpush.bf16.msra.mxu0 %v813
    %1663 = vmatpush.bf16.msra.mxu0 %v811
    %1664 = vmatpush.bf16.msra.mxu0 %v809
    %1665 = vmatpush.bf16.msra.mxu0 %v807
    %1666 = vmatpush.bf16.msra.mxu0 %v805
    %1667 = vmatpush.bf16.msra.mxu0 %v803
    %1668 = vmatpush.bf16.msra.mxu0 %v801
    %1669 = vmatmul.bf16.gmra.mxu0 %v281
    %v1670 = vpop.f32.mrf.mxu0
    %v1671 = vadd.f32 %v1598, %v1670
    %v1672 = vpop.f32.mrf.mxu0
    %v1673 = vadd.f32 %v1600, %v1672
    %1674 = vmatmul.bf16.gmra.mxu0 %v288
    %v1675 = vpop.f32.mrf.mxu0
    %v1676 = vadd.f32 %v1603, %v1675
    %v1677 = vpop.f32.mrf.mxu0
    %v1678 = vadd.f32 %v1605, %v1677
    %1679 = vmatmul.bf16.gmra.mxu0 %v295
    %v1680 = vpop.f32.mrf.mxu0
    %v1681 = vadd.f32 %v1608, %v1680
    %v1682 = vpop.f32.mrf.mxu0
    %v1683 = vadd.f32 %v1610, %v1682
    %1684 = vmatmul.bf16.gmra.mxu0 %v302
    %v1685 = vpop.f32.mrf.mxu0
    %v1686 = vadd.f32 %v1613, %v1685
    %v1687 = vpop.f32.mrf.mxu0
    %v1688 = vadd.f32 %v1615, %v1687
    %1689 = vmatmul.bf16.gmra.mxu0 %v309
    %v1690 = vpop.f32.mrf.mxu0
    %v1691 = vadd.f32 %v1618, %v1690
    %v1692 = vpop.f32.mrf.mxu0
    %v1693 = vadd.f32 %v1620, %v1692
    %1694 = vmatmul.bf16.gmra.mxu0 %v316
    %v1695 = vpop.f32.mrf.mxu0
    %v1696 = vadd.f32 %v1623, %v1695
    %v1697 = vpop.f32.mrf.mxu0
    %v1698 = vadd.f32 %v1625, %v1697
    %1699 = vmatmul.bf16.gmra.mxu0 %v323
    %v1700 = vpop.f32.mrf.mxu0
    %v1701 = vadd.f32 %v1628, %v1700
    %v1702 = vpop.f32.mrf.mxu0
    %v1703 = vadd.f32 %v1630, %v1702
    %1704 = vmatmul.bf16.gmra.mxu0 %v330
    %v1705 = vpop.f32.mrf.mxu0
    %v1706 = vadd.f32 %v1633, %v1705
    %v1707 = vpop.f32.mrf.mxu0
    %v1708 = vadd.f32 %v1635, %v1707
    %1709 = vmatmul.bf16.gmra.mxu0 %v337
    %v1710 = vpop.f32.mrf.mxu0
    %v1711 = vadd.f32 %v1638, %v1710
    %v1712 = vpop.f32.mrf.mxu0
    %v1713 = vadd.f32 %v1640, %v1712
    %1714 = vmatmul.bf16.gmra.mxu0 %v344
    %v1715 = vpop.f32.mrf.mxu0
    %v1716 = vadd.f32 %v1643, %v1715
    %v1717 = vpop.f32.mrf.mxu0
    %v1718 = vadd.f32 %v1645, %v1717
    %1719 = vmatmul.bf16.gmra.mxu0 %v351
    %v1720 = vpop.f32.mrf.mxu0
    %v1721 = vadd.f32 %v1648, %v1720
    %v1722 = vpop.f32.mrf.mxu0
    %v1723 = vadd.f32 %v1650, %v1722
    %1724 = vmatmul.bf16.gmra.mxu0 %v358
    %v1725 = vpop.f32.mrf.mxu0
    %v1726 = vadd.f32 %v1653, %v1725
    %v1727 = vpop.f32.mrf.mxu0
    %v1728 = vadd.f32 %v1655, %v1727
    %1729 = vmatmul.bf16.gmra.mxu0 %v365
    %v1730 = vpop.f32.mrf.mxu0
    %v1731 = vadd.f32 %v1658, %v1730
    %v1732 = vpop.f32.mrf.mxu0
    %1733 = vdwg.mxu0
    %1734 = vmatpush.bf16.msra.mxu0 %v831
    %1735 = vmatpush.bf16.msra.mxu0 %v829
    %1736 = vmatpush.bf16.msra.mxu0 %v827
    %1737 = vmatpush.bf16.msra.mxu0 %v825
    %1738 = vmatpush.bf16.msra.mxu0 %v823
    %1739 = vmatpush.bf16.msra.mxu0 %v821
    %1740 = vmatpush.bf16.msra.mxu0 %v819
    %1741 = vmatpush.bf16.msra.mxu0 %v817
    %1742 = vmatmul.bf16.gmra.mxu0 %v282
    %v1743 = vpop.f32.mrf.mxu0
    %v1744 = vadd.f32 %v1671, %v1743
    %v1745 = vpop.f32.mrf.mxu0
    %v1746 = vadd.f32 %v1673, %v1745
    %1747 = vmatmul.bf16.gmra.mxu0 %v289
    %v1748 = vpop.f32.mrf.mxu0
    %v1749 = vadd.f32 %v1676, %v1748
    %v1750 = vpop.f32.mrf.mxu0
    %v1751 = vadd.f32 %v1678, %v1750
    %1752 = vmatmul.bf16.gmra.mxu0 %v296
    %v1753 = vpop.f32.mrf.mxu0
    %v1754 = vadd.f32 %v1681, %v1753
    %v1755 = vpop.f32.mrf.mxu0
    %v1756 = vadd.f32 %v1683, %v1755
    %1757 = vmatmul.bf16.gmra.mxu0 %v303
    %v1758 = vpop.f32.mrf.mxu0
    %v1759 = vadd.f32 %v1686, %v1758
    %v1760 = vpop.f32.mrf.mxu0
    %v1761 = vadd.f32 %v1688, %v1760
    %1762 = vmatmul.bf16.gmra.mxu0 %v310
    %v1763 = vpop.f32.mrf.mxu0
    %v1764 = vadd.f32 %v1691, %v1763
    %v1765 = vpop.f32.mrf.mxu0
    %v1766 = vadd.f32 %v1693, %v1765
    %1767 = vmatmul.bf16.gmra.mxu0 %v317
    %v1768 = vpop.f32.mrf.mxu0
    %v1769 = vadd.f32 %v1696, %v1768
    %v1770 = vpop.f32.mrf.mxu0
    %v1771 = vadd.f32 %v1698, %v1770
    %1772 = vmatmul.bf16.gmra.mxu0 %v324
    %v1773 = vpop.f32.mrf.mxu0
    %v1774 = vadd.f32 %v1701, %v1773
    %v1775 = vpop.f32.mrf.mxu0
    %v1776 = vadd.f32 %v1703, %v1775
    %1777 = vmatmul.bf16.gmra.mxu0 %v331
    %v1778 = vpop.f32.mrf.mxu0
    %v1779 = vadd.f32 %v1706, %v1778
    %v1780 = vpop.f32.mrf.mxu0
    %v1781 = vadd.f32 %v1708, %v1780
    %1782 = vmatmul.bf16.gmra.mxu0 %v338
    %v1783 = vpop.f32.mrf.mxu0
    %v1784 = vadd.f32 %v1711, %v1783
    %v1785 = vpop.f32.mrf.mxu0
    %v1786 = vadd.f32 %v1713, %v1785
    %1787 = vmatmul.bf16.gmra.mxu0 %v345
    %v1788 = vpop.f32.mrf.mxu0
    %v1789 = vadd.f32 %v1716, %v1788
    %v1790 = vpop.f32.mrf.mxu0
    %v1791 = vadd.f32 %v1718, %v1790
    %1792 = vmatmul.bf16.gmra.mxu0 %v352
    %v1793 = vpop.f32.mrf.mxu0
    %v1794 = vadd.f32 %v1721, %v1793
    %v1795 = vpop.f32.mrf.mxu0
    %v1796 = vadd.f32 %v1723, %v1795
    %1797 = vmatmul.bf16.gmra.mxu0 %v359
    %v1798 = vpop.f32.mrf.mxu0
    %v1799 = vadd.f32 %v1726, %v1798
    %v1800 = vpop.f32.mrf.mxu0
    %v1801 = vadd.f32 %v1728, %v1800
    %1802 = vmatmul.bf16.gmra.mxu0 %v366
    %v1803 = vpop.f32.mrf.mxu0
    %v1804 = vadd.f32 %v1731, %v1803
    %v1805 = vpop.f32.mrf.mxu0
    %1806 = vdwg.mxu0
    %1807 = vmatpush.bf16.msra.mxu0 %v847
    %1808 = vmatpush.bf16.msra.mxu0 %v845
    %1809 = vmatpush.bf16.msra.mxu0 %v843
    %1810 = vmatpush.bf16.msra.mxu0 %v841
    %1811 = vmatpush.bf16.msra.mxu0 %v839
    %1812 = vmatpush.bf16.msra.mxu0 %v837
    %1813 = vmatpush.bf16.msra.mxu0 %v835
    %1814 = vmatpush.bf16.msra.mxu0 %v833
    %1815 = vmatmul.bf16.gmra.mxu0 %v283
    %v1816 = vpop.f32.mrf.mxu0
    %v1817 = vadd.f32 %v1744, %v1816
    %v1818 = vpop.f32.mrf.mxu0
    %v1819 = vadd.f32 %v1746, %v1818
    %1820 = vmatmul.bf16.gmra.mxu0 %v290
    %v1821 = vpop.f32.mrf.mxu0
    %v1822 = vadd.f32 %v1749, %v1821
    %v1823 = vpop.f32.mrf.mxu0
    %v1824 = vadd.f32 %v1751, %v1823
    %1825 = vmatmul.bf16.gmra.mxu0 %v297
    %v1826 = vpop.f32.mrf.mxu0
    %v1827 = vadd.f32 %v1754, %v1826
    %v1828 = vpop.f32.mrf.mxu0
    %v1829 = vadd.f32 %v1756, %v1828
    %1830 = vmatmul.bf16.gmra.mxu0 %v304
    %v1831 = vpop.f32.mrf.mxu0
    %v1832 = vadd.f32 %v1759, %v1831
    %v1833 = vpop.f32.mrf.mxu0
    %v1834 = vadd.f32 %v1761, %v1833
    %1835 = vmatmul.bf16.gmra.mxu0 %v311
    %v1836 = vpop.f32.mrf.mxu0
    %v1837 = vadd.f32 %v1764, %v1836
    %v1838 = vpop.f32.mrf.mxu0
    %v1839 = vadd.f32 %v1766, %v1838
    %1840 = vmatmul.bf16.gmra.mxu0 %v318
    %v1841 = vpop.f32.mrf.mxu0
    %v1842 = vadd.f32 %v1769, %v1841
    %v1843 = vpop.f32.mrf.mxu0
    %v1844 = vadd.f32 %v1771, %v1843
    %1845 = vmatmul.bf16.gmra.mxu0 %v325
    %v1846 = vpop.f32.mrf.mxu0
    %v1847 = vadd.f32 %v1774, %v1846
    %v1848 = vpop.f32.mrf.mxu0
    %v1849 = vadd.f32 %v1776, %v1848
    %1850 = vmatmul.bf16.gmra.mxu0 %v332
    %v1851 = vpop.f32.mrf.mxu0
    %v1852 = vadd.f32 %v1779, %v1851
    %v1853 = vpop.f32.mrf.mxu0
    %v1854 = vadd.f32 %v1781, %v1853
    %1855 = vmatmul.bf16.gmra.mxu0 %v339
    %v1856 = vpop.f32.mrf.mxu0
    %v1857 = vadd.f32 %v1784, %v1856
    %v1858 = vpop.f32.mrf.mxu0
    %v1859 = vadd.f32 %v1786, %v1858
    %1860 = vmatmul.bf16.gmra.mxu0 %v346
    %v1861 = vpop.f32.mrf.mxu0
    %v1862 = vadd.f32 %v1789, %v1861
    %v1863 = vpop.f32.mrf.mxu0
    %v1864 = vadd.f32 %v1791, %v1863
    %1865 = vmatmul.bf16.gmra.mxu0 %v353
    %v1866 = vpop.f32.mrf.mxu0
    %v1867 = vadd.f32 %v1794, %v1866
    %v1868 = vpop.f32.mrf.mxu0
    %v1869 = vadd.f32 %v1796, %v1868
    %1870 = vmatmul.bf16.gmra.mxu0 %v360
    %v1871 = vpop.f32.mrf.mxu0
    %v1872 = vadd.f32 %v1799, %v1871
    %v1873 = vpop.f32.mrf.mxu0
    %v1874 = vadd.f32 %v1801, %v1873
    %1875 = vmatmul.bf16.gmra.mxu0 %v367
    %v1876 = vpop.f32.mrf.mxu0
    %v1877 = vadd.f32 %v1804, %v1876
    %v1878 = vpop.f32.mrf.mxu0
    %1879 = vdwg.mxu0
    %1880 = vmatpush.bf16.msra.mxu0 %v863
    %1881 = vmatpush.bf16.msra.mxu0 %v861
    %1882 = vmatpush.bf16.msra.mxu0 %v859
    %1883 = vmatpush.bf16.msra.mxu0 %v857
    %1884 = vmatpush.bf16.msra.mxu0 %v855
    %1885 = vmatpush.bf16.msra.mxu0 %v853
    %1886 = vmatpush.bf16.msra.mxu0 %v851
    %1887 = vmatpush.bf16.msra.mxu0 %v849
    %1888 = vmatmul.bf16.gmra.mxu0 %v284
    %v1889 = vpop.f32.mrf.mxu0
    %v1890 = vadd.f32 %v1817, %v1889
    %v1891 = vpop.f32.mrf.mxu0
    %v1892 = vadd.f32 %v1819, %v1891
    %1893 = vmatmul.bf16.gmra.mxu0 %v291
    %v1894 = vpop.f32.mrf.mxu0
    %v1895 = vadd.f32 %v1822, %v1894
    %v1896 = vpop.f32.mrf.mxu0
    %v1897 = vadd.f32 %v1824, %v1896
    %1898 = vmatmul.bf16.gmra.mxu0 %v298
    %v1899 = vpop.f32.mrf.mxu0
    %v1900 = vadd.f32 %v1827, %v1899
    %v1901 = vpop.f32.mrf.mxu0
    %v1902 = vadd.f32 %v1829, %v1901
    %1903 = vmatmul.bf16.gmra.mxu0 %v305
    %v1904 = vpop.f32.mrf.mxu0
    %v1905 = vadd.f32 %v1832, %v1904
    %v1906 = vpop.f32.mrf.mxu0
    %v1907 = vadd.f32 %v1834, %v1906
    %1908 = vmatmul.bf16.gmra.mxu0 %v312
    %v1909 = vpop.f32.mrf.mxu0
    %v1910 = vadd.f32 %v1837, %v1909
    %v1911 = vpop.f32.mrf.mxu0
    %v1912 = vadd.f32 %v1839, %v1911
    %1913 = vmatmul.bf16.gmra.mxu0 %v319
    %v1914 = vpop.f32.mrf.mxu0
    %v1915 = vadd.f32 %v1842, %v1914
    %v1916 = vpop.f32.mrf.mxu0
    %v1917 = vadd.f32 %v1844, %v1916
    %1918 = vmatmul.bf16.gmra.mxu0 %v326
    %v1919 = vpop.f32.mrf.mxu0
    %v1920 = vadd.f32 %v1847, %v1919
    %v1921 = vpop.f32.mrf.mxu0
    %v1922 = vadd.f32 %v1849, %v1921
    %1923 = vmatmul.bf16.gmra.mxu0 %v333
    %v1924 = vpop.f32.mrf.mxu0
    %v1925 = vadd.f32 %v1852, %v1924
    %v1926 = vpop.f32.mrf.mxu0
    %v1927 = vadd.f32 %v1854, %v1926
    %1928 = vmatmul.bf16.gmra.mxu0 %v340
    %v1929 = vpop.f32.mrf.mxu0
    %v1930 = vadd.f32 %v1857, %v1929
    %v1931 = vpop.f32.mrf.mxu0
    %v1932 = vadd.f32 %v1859, %v1931
    %1933 = vmatmul.bf16.gmra.mxu0 %v347
    %v1934 = vpop.f32.mrf.mxu0
    %v1935 = vadd.f32 %v1862, %v1934
    %v1936 = vpop.f32.mrf.mxu0
    %v1937 = vadd.f32 %v1864, %v1936
    %1938 = vmatmul.bf16.gmra.mxu0 %v354
    %v1939 = vpop.f32.mrf.mxu0
    %v1940 = vadd.f32 %v1867, %v1939
    %v1941 = vpop.f32.mrf.mxu0
    %v1942 = vadd.f32 %v1869, %v1941
    %1943 = vmatmul.bf16.gmra.mxu0 %v361
    %v1944 = vpop.f32.mrf.mxu0
    %v1945 = vadd.f32 %v1872, %v1944
    %v1946 = vpop.f32.mrf.mxu0
    %v1947 = vadd.f32 %v1874, %v1946
    %1948 = vmatmul.bf16.gmra.mxu0 %v368
    %v1949 = vpop.f32.mrf.mxu0
    %v1950 = vadd.f32 %v1877, %v1949
    %v1951 = vpop.f32.mrf.mxu0
    %1952 = vdwg.mxu0
    %1953 = vmatpush.bf16.msra.mxu0 0
    %1954 = vmatpush.bf16.msra.mxu0 0
    %1955 = vmatpush.bf16.msra.mxu0 0
    %1956 = vmatpush.bf16.msra.mxu0 0
    %1957 = vmatpush.bf16.msra.mxu0 0
    %1958 = vmatpush.bf16.msra.mxu0 0
    %1959 = vmatpush.bf16.msra.mxu0 0
    %1960 = vmatpush.bf16.msra.mxu0 %v865
    %1961 = vmatmul.bf16.gmra.mxu0 %v966
    %v1962 = vpop.f32.mrf.mxu0
    %v1963 = vadd.f32 %v1890, %v1962
    %v1964 = vpop.f32.mrf.mxu0
    %v1965 = vadd.f32 %v1892, %v1964
    %1966 = vmatmul.bf16.gmra.mxu0 %v969
    %v1967 = vpop.f32.mrf.mxu0
    %v1968 = vadd.f32 %v1895, %v1967
    %v1969 = vpop.f32.mrf.mxu0
    %v1970 = vadd.f32 %v1897, %v1969
    %1971 = vmatmul.bf16.gmra.mxu0 %v972
    %v1972 = vpop.f32.mrf.mxu0
    %v1973 = vadd.f32 %v1900, %v1972
    %v1974 = vpop.f32.mrf.mxu0
    %v1975 = vadd.f32 %v1902, %v1974
    %1976 = vmatmul.bf16.gmra.mxu0 %v975
    %v1977 = vpop.f32.mrf.mxu0
    %v1978 = vadd.f32 %v1905, %v1977
    %v1979 = vpop.f32.mrf.mxu0
    %v1980 = vadd.f32 %v1907, %v1979
    %1981 = vmatmul.bf16.gmra.mxu0 %v978
    %v1982 = vpop.f32.mrf.mxu0
    %v1983 = vadd.f32 %v1910, %v1982
    %v1984 = vpop.f32.mrf.mxu0
    %v1985 = vadd.f32 %v1912, %v1984
    %1986 = vmatmul.bf16.gmra.mxu0 %v981
    %v1987 = vpop.f32.mrf.mxu0
    %v1988 = vadd.f32 %v1915, %v1987
    %v1989 = vpop.f32.mrf.mxu0
    %v1990 = vadd.f32 %v1917, %v1989
    %1991 = vmatmul.bf16.gmra.mxu0 %v984
    %v1992 = vpop.f32.mrf.mxu0
    %v1993 = vadd.f32 %v1920, %v1992
    %v1994 = vpop.f32.mrf.mxu0
    %v1995 = vadd.f32 %v1922, %v1994
    %1996 = vmatmul.bf16.gmra.mxu0 %v987
    %v1997 = vpop.f32.mrf.mxu0
    %v1998 = vadd.f32 %v1925, %v1997
    %v1999 = vpop.f32.mrf.mxu0
    %v2000 = vadd.f32 %v1927, %v1999
    %2001 = vmatmul.bf16.gmra.mxu0 %v990
    %v2002 = vpop.f32.mrf.mxu0
    %v2003 = vadd.f32 %v1930, %v2002
    %v2004 = vpop.f32.mrf.mxu0
    %v2005 = vadd.f32 %v1932, %v2004
    %2006 = vmatmul.bf16.gmra.mxu0 %v993
    %v2007 = vpop.f32.mrf.mxu0
    %v2008 = vadd.f32 %v1935, %v2007
    %v2009 = vpop.f32.mrf.mxu0
    %v2010 = vadd.f32 %v1937, %v2009
    %2011 = vmatmul.bf16.gmra.mxu0 %v996
    %v2012 = vpop.f32.mrf.mxu0
    %v2013 = vadd.f32 %v1940, %v2012
    %v2014 = vpop.f32.mrf.mxu0
    %v2015 = vadd.f32 %v1942, %v2014
    %2016 = vmatmul.bf16.gmra.mxu0 %v999
    %v2017 = vpop.f32.mrf.mxu0
    %v2018 = vadd.f32 %v1945, %v2017
    %v2019 = vpop.f32.mrf.mxu0
    %v2020 = vadd.f32 %v1947, %v2019
    %2021 = vmatmul.bf16.gmra.mxu0 %v1002
    %v2022 = vpop.f32.mrf.mxu0
    %v2023 = vadd.f32 %v1950, %v2022
    %v2024 = vpop.f32.mrf.mxu0
    %2025 = vdwg.mxu0
    %v2026 = vmax.f32 %v1452, 0.0
    %v2027 = vmax.f32 %v1963, 0.0
    %v2028 = vmax.f32 %v1454, 0.0
    %v2029 = vmax.f32 %v1965, 0.0
    %v2030 = vmax.f32 %v1457, 0.0
    %v2031 = vmax.f32 %v1968, 0.0
    %v2032 = vmax.f32 %v1459, 0.0
    %v2033 = vmax.f32 %v1970, 0.0
    %v2034 = vmax.f32 %v1462, 0.0
    %v2035 = vmax.f32 %v1973, 0.0
    %v2036 = vmax.f32 %v1464, 0.0
    %v2037 = vmax.f32 %v1975, 0.0
    %v2038 = vmax.f32 %v1467, 0.0
    %v2039 = vmax.f32 %v1978, 0.0
    %v2040 = vmax.f32 %v1469, 0.0
    %v2041 = vmax.f32 %v1980, 0.0
    %v2042 = vmax.f32 %v1472, 0.0
    %v2043 = vmax.f32 %v1983, 0.0
    %v2044 = vmax.f32 %v1474, 0.0
    %v2045 = vmax.f32 %v1985, 0.0
    %v2046 = vmax.f32 %v1477, 0.0
    %v2047 = vmax.f32 %v1988, 0.0
    %v2048 = vmax.f32 %v1479, 0.0
    %v2049 = vmax.f32 %v1990, 0.0
    %v2050 = vmax.f32 %v1482, 0.0
    %v2051 = vmax.f32 %v1993, 0.0
    %v2052 = vmax.f32 %v1484, 0.0
    %v2053 = vmax.f32 %v1995, 0.0
    %v2054 = vmax.f32 %v1487, 0.0
    %v2055 = vmax.f32 %v1998, 0.0
    %v2056 = vmax.f32 %v1489, 0.0
    %v2057 = vmax.f32 %v2000, 0.0
    %v2058 = vmax.f32 %v1492, 0.0
    %v2059 = vmax.f32 %v2003, 0.0
    %v2060 = vmax.f32 %v1494, 0.0
    %v2061 = vmax.f32 %v2005, 0.0
    %v2062 = vmax.f32 %v1497, 0.0
    %v2063 = vmax.f32 %v2008, 0.0
    %v2064 = vmax.f32 %v1499, 0.0
    %v2065 = vmax.f32 %v2010, 0.0
    %v2066 = vmax.f32 %v1502, 0.0
    %v2067 = vmax.f32 %v2013, 0.0
    %v2068 = vmax.f32 %v1504, 0.0
    %v2069 = vmax.f32 %v2015, 0.0
    %v2070 = vmax.f32 %v1507, 0.0
    %v2071 = vmax.f32 %v2018, 0.0
    %v2072 = vmax.f32 %v1509, 0.0
    %v2073 = vmax.f32 %v2020, 0.0
    %v2074 = vmax.f32 %v1512, 0.0
    %v2075 = vmax.f32 %v2023, 0.0
    %v2076 = vpack.c.bf16 %v2028, %v2026
    %v2077 = vpack.c.bf16 %v2029, %v2027
    %v2078 = vpack.c.bf16 %v2032, %v2030
    %v2079 = vpack.c.bf16 %v2033, %v2031
    %v2080 = vpack.c.bf16 %v2036, %v2034
    %v2081 = vpack.c.bf16 %v2037, %v2035
    %v2082 = vpack.c.bf16 %v2040, %v2038
    %v2083 = vpack.c.bf16 %v2041, %v2039
    %v2084 = vpack.c.bf16 %v2044, %v2042
    %v2085 = vpack.c.bf16 %v2045, %v2043
    %v2086 = vpack.c.bf16 %v2048, %v2046
    %v2087 = vpack.c.bf16 %v2049, %v2047
    %v2088 = vpack.c.bf16 %v2052, %v2050
    %v2089 = vpack.c.bf16 %v2053, %v2051
    %v2090 = vpack.c.bf16 %v2056, %v2054
    %v2091 = vpack.c.bf16 %v2057, %v2055
    %v2092 = vpack.c.bf16 %v2060, %v2058
    %v2093 = vpack.c.bf16 %v2061, %v2059
    %v2094 = vpack.c.bf16 %v2064, %v2062
    %v2095 = vpack.c.bf16 %v2065, %v2063
    %v2096 = vpack.c.bf16 %v2068, %v2066
    %v2097 = vpack.c.bf16 %v2069, %v2067
    %v2098 = vpack.c.bf16 %v2072, %v2070
    %v2099 = vpack.c.bf16 %v2073, %v2071
    %v2100 = vpack.c.bf16 %v2074, %v2074
    %v2101 = vpack.c.bf16 %v2075, %v2075
    %v2102 = vld [vmem:[#allocation8] sm:$0xff]
    %v2103 = vld [vmem:[#allocation8 + $0x8] sm:$0xff]
    %v2104 = vld [vmem:[#allocation8 + $0x10] sm:$0xff]
    %v2105 = vld [vmem:[#allocation8 + $0x18] sm:$0xff]
    %v2106 = vld [vmem:[#allocation8 + $0x20] sm:$0xff]
    %v2107 = vld [vmem:[#allocation8 + $0x28] sm:$0xff]
    %v2108 = vld [vmem:[#allocation8 + $0x30] sm:$0xff]
    %v2109 = vld [vmem:[#allocation8 + $0x38] sm:$0xff]
    %v2110 = vld [vmem:[#allocation8 + $0x40] sm:$0xff]
    %v2111 = vld [vmem:[#allocation8 + $0x48] sm:$0xff]
    %v2112 = vld [vmem:[#allocation8 + $0x50] sm:$0xff]
    %v2113 = vld [vmem:[#allocation8 + $0x58] sm:$0xff]
    %v2114 = vld [vmem:[#allocation8 + $0x60] sm:$0xff]
    %v2115 = vld [vmem:[#allocation8 + $0x68] sm:$0xff]
    %v2116 = vld [vmem:[#allocation8 + $0x70] sm:$0xff]
    %v2117 = vld [vmem:[#allocation8 + $0x78] sm:$0xff]
    %v2118 = vld [vmem:[#allocation8 + $0x80] sm:$0xff]
    %v2119 = vld [vmem:[#allocation8 + $0x88] sm:$0xff]
    %v2120 = vld [vmem:[#allocation8 + $0x90] sm:$0xff]
    %v2121 = vld [vmem:[#allocation8 + $0x98] sm:$0xff]
    %v2122 = vld [vmem:[#allocation8 + $0xa0] sm:$0xff]
    %v2123 = vld [vmem:[#allocation8 + $0xa8] sm:$0xff]
    %v2124 = vld [vmem:[#allocation8 + $0xb0] sm:$0xff]
    %v2125 = vld [vmem:[#allocation8 + $0xb8] sm:$0xff]
    %v2126 = vld [vmem:[#allocation8 + $0xc0] sm:$0xff]
    %v2127 = vld [vmem:[#allocation8 + $0xc8] sm:$0xff]
    %v2128 = vld [vmem:[#allocation8 + $0xd0] sm:$0xff]
    %v2129 = vld [vmem:[#allocation8 + $0xd8] sm:$0xff]
    %v2130 = vld [vmem:[#allocation8 + $0xe0] sm:$0xff]
    %v2131 = vld [vmem:[#allocation8 + $0xe8] sm:$0xff]
    %v2132 = vld [vmem:[#allocation8 + $0xf0] sm:$0xff]
    %v2133 = vld [vmem:[#allocation8 + $0xf8] sm:$0xff]
    %v2134 = vld [vmem:[%s4] sm:$0x3]
    %v2136 = vperm.slane %v2134, 0
    %v2137 = vperm.slane %v2134, 1
    %v2172 = vunpack.c.l.b16 %v2102
    %v2173 = vunpack.c.h.b16 %v2102
    %v2174 = vunpack.c.l.b16 %v2103
    %v2175 = vunpack.c.h.b16 %v2103
    %v2176 = vunpack.c.l.b16 %v2104
    %v2177 = vunpack.c.h.b16 %v2104
    %v2178 = vunpack.c.l.b16 %v2105
    %v2179 = vunpack.c.h.b16 %v2105
    %v2180 = vunpack.c.l.b16 %v2106
    %v2181 = vunpack.c.h.b16 %v2106
    %v2182 = vunpack.c.l.b16 %v2107
    %v2183 = vunpack.c.h.b16 %v2107
    %v2184 = vunpack.c.l.b16 %v2108
    %v2185 = vunpack.c.h.b16 %v2108
    %v2186 = vunpack.c.l.b16 %v2109
    %v2187 = vunpack.c.h.b16 %v2109
    %v2188 = vunpack.c.l.b16 %v2110
    %v2189 = vunpack.c.h.b16 %v2110
    %v2190 = vunpack.c.l.b16 %v2111
    %v2191 = vunpack.c.h.b16 %v2111
    %v2192 = vunpack.c.l.b16 %v2112
    %v2193 = vunpack.c.h.b16 %v2112
    %v2194 = vunpack.c.l.b16 %v2113
    %v2195 = vunpack.c.h.b16 %v2113
    %v2196 = vunpack.c.l.b16 %v2114
    %v2197 = vunpack.c.h.b16 %v2114
    %v2198 = vunpack.c.l.b16 %v2115
    %v2199 = vunpack.c.h.b16 %v2115
    %v2200 = vunpack.c.l.b16 %v2116
    %v2201 = vunpack.c.h.b16 %v2116
    %v2202 = vunpack.c.l.b16 %v2117
    %v2203 = vunpack.c.h.b16 %v2117
    %v2204 = vunpack.c.l.b16 %v2118
    %v2205 = vunpack.c.h.b16 %v2118
    %v2206 = vunpack.c.l.b16 %v2119
    %v2207 = vunpack.c.h.b16 %v2119
    %v2208 = vunpack.c.l.b16 %v2120
    %v2209 = vunpack.c.h.b16 %v2120
    %v2210 = vunpack.c.l.b16 %v2121
    %v2211 = vunpack.c.h.b16 %v2121
    %v2212 = vunpack.c.l.b16 %v2122
    %v2213 = vunpack.c.h.b16 %v2122
    %v2214 = vunpack.c.l.b16 %v2123
    %v2215 = vunpack.c.h.b16 %v2123
    %v2216 = vunpack.c.l.b16 %v2124
    %v2217 = vunpack.c.h.b16 %v2124
    %v2218 = vunpack.c.l.b16 %v2125
    %v2219 = vunpack.c.h.b16 %v2125
    %v2220 = vunpack.c.l.b16 %v2126
    %v2221 = vunpack.c.h.b16 %v2126
    %v2222 = vunpack.c.l.b16 %v2127
    %v2223 = vunpack.c.h.b16 %v2127
    %v2224 = vunpack.c.l.b16 %v2128
    %v2225 = vunpack.c.h.b16 %v2128
    %v2226 = vunpack.c.l.b16 %v2129
    %v2227 = vunpack.c.h.b16 %v2129
    %v2228 = vunpack.c.l.b16 %v2130
    %v2229 = vunpack.c.h.b16 %v2130
    %v2230 = vunpack.c.l.b16 %v2131
    %v2231 = vunpack.c.h.b16 %v2131
    %v2232 = vunpack.c.l.b16 %v2132
    %v2233 = vunpack.c.h.b16 %v2132
    %v2234 = vunpack.c.l.b16 %v2133
    %v2235 = vunpack.c.h.b16 %v2133
    %v2236 = vpack.c.b16 %v2174, %v2172
    %v2237 = vpack.c.b16 %v2175, %v2173
    %v2238 = vpack.c.b16 %v2178, %v2176
    %v2239 = vpack.c.b16 %v2179, %v2177
    %v2240 = vpack.c.b16 %v2182, %v2180
    %v2241 = vpack.c.b16 %v2183, %v2181
    %v2242 = vpack.c.b16 %v2186, %v2184
    %v2243 = vpack.c.b16 %v2187, %v2185
    %v2244 = vpack.c.b16 %v2190, %v2188
    %v2245 = vpack.c.b16 %v2191, %v2189
    %v2246 = vpack.c.b16 %v2194, %v2192
    %v2247 = vpack.c.b16 %v2195, %v2193
    %v2248 = vpack.c.b16 %v2198, %v2196
    %v2249 = vpack.c.b16 %v2199, %v2197
    %v2250 = vpack.c.b16 %v2202, %v2200
    %v2251 = vpack.c.b16 %v2203, %v2201
    %v2252 = vpack.c.b16 %v2206, %v2204
    %v2253 = vpack.c.b16 %v2207, %v2205
    %v2254 = vpack.c.b16 %v2210, %v2208
    %v2255 = vpack.c.b16 %v2211, %v2209
    %v2256 = vpack.c.b16 %v2214, %v2212
    %v2257 = vpack.c.b16 %v2215, %v2213
    %v2258 = vpack.c.b16 %v2218, %v2216
    %v2259 = vpack.c.b16 %v2219, %v2217
    %v2260 = vpack.c.b16 %v2222, %v2220
    %v2261 = vpack.c.b16 %v2223, %v2221
    %v2262 = vpack.c.b16 %v2226, %v2224
    %v2263 = vpack.c.b16 %v2227, %v2225
    %v2264 = vpack.c.b16 %v2230, %v2228
    %v2265 = vpack.c.b16 %v2231, %v2229
    %v2266 = vpack.c.b16 %v2234, %v2232
    %v2267 = vpack.c.b16 %v2235, %v2233
    %2300 = vmatpush.bf16.msra.mxu0 %v2250
    %2301 = vmatpush.bf16.msra.mxu0 %v2248
    %2302 = vmatpush.bf16.msra.mxu0 %v2246
    %2303 = vmatpush.bf16.msra.mxu0 %v2244
    %2304 = vmatpush.bf16.msra.mxu0 %v2242
    %2305 = vmatpush.bf16.msra.mxu0 %v2240
    %2306 = vmatpush.bf16.msra.mxu0 %v2238
    %2307 = vmatpush.bf16.msra.mxu0 %v2236
    %2308 = vmatmul.bf16.gmra.mxu0 %v2076
    %v2309 = vpop.f32.mrf.mxu0
    %v2310 = vadd.f32 %v2136, %v2309
    %v2311 = vpop.f32.mrf.mxu0
    %v2312 = vadd.f32 %v2136, %v2311
    %2313 = vmatmul.bf16.gmra.mxu0 %v2078
    %v2314 = vpop.f32.mrf.mxu0
    %v2315 = vadd.f32 %v2136, %v2314
    %v2316 = vpop.f32.mrf.mxu0
    %v2317 = vadd.f32 %v2136, %v2316
    %2318 = vmatmul.bf16.gmra.mxu0 %v2080
    %v2319 = vpop.f32.mrf.mxu0
    %v2320 = vadd.f32 %v2136, %v2319
    %v2321 = vpop.f32.mrf.mxu0
    %v2322 = vadd.f32 %v2136, %v2321
    %2323 = vmatmul.bf16.gmra.mxu0 %v2082
    %v2324 = vpop.f32.mrf.mxu0
    %v2325 = vadd.f32 %v2136, %v2324
    %v2326 = vpop.f32.mrf.mxu0
    %v2327 = vadd.f32 %v2136, %v2326
    %2328 = vmatmul.bf16.gmra.mxu0 %v2084
    %v2329 = vpop.f32.mrf.mxu0
    %v2330 = vadd.f32 %v2136, %v2329
    %v2331 = vpop.f32.mrf.mxu0
    %v2332 = vadd.f32 %v2136, %v2331
    %2333 = vmatmul.bf16.gmra.mxu0 %v2086
    %v2334 = vpop.f32.mrf.mxu0
    %v2335 = vadd.f32 %v2136, %v2334
    %v2336 = vpop.f32.mrf.mxu0
    %v2337 = vadd.f32 %v2136, %v2336
    %2338 = vmatmul.bf16.gmra.mxu0 %v2088
    %v2339 = vpop.f32.mrf.mxu0
    %v2340 = vadd.f32 %v2136, %v2339
    %v2341 = vpop.f32.mrf.mxu0
    %v2342 = vadd.f32 %v2136, %v2341
    %2343 = vmatmul.bf16.gmra.mxu0 %v2090
    %v2344 = vpop.f32.mrf.mxu0
    %v2345 = vadd.f32 %v2136, %v2344
    %v2346 = vpop.f32.mrf.mxu0
    %v2347 = vadd.f32 %v2136, %v2346
    %2348 = vmatmul.bf16.gmra.mxu0 %v2092
    %v2349 = vpop.f32.mrf.mxu0
    %v2350 = vadd.f32 %v2136, %v2349
    %v2351 = vpop.f32.mrf.mxu0
    %v2352 = vadd.f32 %v2136, %v2351
    %2353 = vmatmul.bf16.gmra.mxu0 %v2094
    %v2354 = vpop.f32.mrf.mxu0
    %v2355 = vadd.f32 %v2136, %v2354
    %v2356 = vpop.f32.mrf.mxu0
    %v2357 = vadd.f32 %v2136, %v2356
    %2358 = vmatmul.bf16.gmra.mxu0 %v2096
    %v2359 = vpop.f32.mrf.mxu0
    %v2360 = vadd.f32 %v2136, %v2359
    %v2361 = vpop.f32.mrf.mxu0
    %v2362 = vadd.f32 %v2136, %v2361
    %2363 = vmatmul.bf16.gmra.mxu0 %v2098
    %v2364 = vpop.f32.mrf.mxu0
    %v2365 = vadd.f32 %v2136, %v2364
    %v2366 = vpop.f32.mrf.mxu0
    %v2367 = vadd.f32 %v2136, %v2366
    %2368 = vmatmul.bf16.gmra.mxu0 %v2100
    %v2369 = vpop.f32.mrf.mxu0
    %v2370 = vadd.f32 %v2136, %v2369
    %v2371 = vpop.f32.mrf.mxu0
    %2372 = vdwg.mxu0
    %2373 = vmatpush.bf16.msra.mxu0 %v2266
    %2374 = vmatpush.bf16.msra.mxu0 %v2264
    %2375 = vmatpush.bf16.msra.mxu0 %v2262
    %2376 = vmatpush.bf16.msra.mxu0 %v2260
    %2377 = vmatpush.bf16.msra.mxu0 %v2258
    %2378 = vmatpush.bf16.msra.mxu0 %v2256
    %2379 = vmatpush.bf16.msra.mxu0 %v2254
    %2380 = vmatpush.bf16.msra.mxu0 %v2252
    %2381 = vmatmul.bf16.gmra.mxu0 %v2077
    %v2382 = vpop.f32.mrf.mxu0
    %v2383 = vadd.f32 %v2310, %v2382
    %v2384 = vpop.f32.mrf.mxu0
    %v2385 = vadd.f32 %v2312, %v2384
    %2386 = vmatmul.bf16.gmra.mxu0 %v2079
    %v2387 = vpop.f32.mrf.mxu0
    %v2388 = vadd.f32 %v2315, %v2387
    %v2389 = vpop.f32.mrf.mxu0
    %v2390 = vadd.f32 %v2317, %v2389
    %2391 = vmatmul.bf16.gmra.mxu0 %v2081
    %v2392 = vpop.f32.mrf.mxu0
    %v2393 = vadd.f32 %v2320, %v2392
    %v2394 = vpop.f32.mrf.mxu0
    %v2395 = vadd.f32 %v2322, %v2394
    %2396 = vmatmul.bf16.gmra.mxu0 %v2083
    %v2397 = vpop.f32.mrf.mxu0
    %v2398 = vadd.f32 %v2325, %v2397
    %v2399 = vpop.f32.mrf.mxu0
    %v2400 = vadd.f32 %v2327, %v2399
    %2401 = vmatmul.bf16.gmra.mxu0 %v2085
    %v2402 = vpop.f32.mrf.mxu0
    %v2403 = vadd.f32 %v2330, %v2402
    %v2404 = vpop.f32.mrf.mxu0
    %v2405 = vadd.f32 %v2332, %v2404
    %2406 = vmatmul.bf16.gmra.mxu0 %v2087
    %v2407 = vpop.f32.mrf.mxu0
    %v2408 = vadd.f32 %v2335, %v2407
    %v2409 = vpop.f32.mrf.mxu0
    %v2410 = vadd.f32 %v2337, %v2409
    %2411 = vmatmul.bf16.gmra.mxu0 %v2089
    %v2412 = vpop.f32.mrf.mxu0
    %v2413 = vadd.f32 %v2340, %v2412
    %v2414 = vpop.f32.mrf.mxu0
    %v2415 = vadd.f32 %v2342, %v2414
    %2416 = vmatmul.bf16.gmra.mxu0 %v2091
    %v2417 = vpop.f32.mrf.mxu0
    %v2418 = vadd.f32 %v2345, %v2417
    %v2419 = vpop.f32.mrf.mxu0
    %v2420 = vadd.f32 %v2347, %v2419
    %2421 = vmatmul.bf16.gmra.mxu0 %v2093
    %v2422 = vpop.f32.mrf.mxu0
    %v2423 = vadd.f32 %v2350, %v2422
    %v2424 = vpop.f32.mrf.mxu0
    %v2425 = vadd.f32 %v2352, %v2424
    %2426 = vmatmul.bf16.gmra.mxu0 %v2095
    %v2427 = vpop.f32.mrf.mxu0
    %v2428 = vadd.f32 %v2355, %v2427
    %v2429 = vpop.f32.mrf.mxu0
    %v2430 = vadd.f32 %v2357, %v2429
    %2431 = vmatmul.bf16.gmra.mxu0 %v2097
    %v2432 = vpop.f32.mrf.mxu0
    %v2433 = vadd.f32 %v2360, %v2432
    %v2434 = vpop.f32.mrf.mxu0
    %v2435 = vadd.f32 %v2362, %v2434
    %2436 = vmatmul.bf16.gmra.mxu0 %v2099
    %v2437 = vpop.f32.mrf.mxu0
    %v2438 = vadd.f32 %v2365, %v2437
    %v2439 = vpop.f32.mrf.mxu0
    %v2440 = vadd.f32 %v2367, %v2439
    %2441 = vmatmul.bf16.gmra.mxu0 %v2101
    %v2442 = vpop.f32.mrf.mxu0
    %v2443 = vadd.f32 %v2370, %v2442
    %v2444 = vpop.f32.mrf.mxu0
    %2445 = vdwg.mxu0
    %2446 = vmatpush.bf16.msra.mxu0 %v2251
    %2447 = vmatpush.bf16.msra.mxu0 %v2249
    %2448 = vmatpush.bf16.msra.mxu0 %v2247
    %2449 = vmatpush.bf16.msra.mxu0 %v2245
    %2450 = vmatpush.bf16.msra.mxu0 %v2243
    %2451 = vmatpush.bf16.msra.mxu0 %v2241
    %2452 = vmatpush.bf16.msra.mxu0 %v2239
    %2453 = vmatpush.bf16.msra.mxu0 %v2237
    %2454 = vmatmul.bf16.gmra.mxu0 %v2076
    %v2455 = vpop.f32.mrf.mxu0
    %v2456 = vadd.f32 %v2137, %v2455
    %v2457 = vpop.f32.mrf.mxu0
    %v2458 = vadd.f32 %v2137, %v2457
    %2459 = vmatmul.bf16.gmra.mxu0 %v2078
    %v2460 = vpop.f32.mrf.mxu0
    %v2461 = vadd.f32 %v2137, %v2460
    %v2462 = vpop.f32.mrf.mxu0
    %v2463 = vadd.f32 %v2137, %v2462
    %2464 = vmatmul.bf16.gmra.mxu0 %v2080
    %v2465 = vpop.f32.mrf.mxu0
    %v2466 = vadd.f32 %v2137, %v2465
    %v2467 = vpop.f32.mrf.mxu0
    %v2468 = vadd.f32 %v2137, %v2467
    %2469 = vmatmul.bf16.gmra.mxu0 %v2082
    %v2470 = vpop.f32.mrf.mxu0
    %v2471 = vadd.f32 %v2137, %v2470
    %v2472 = vpop.f32.mrf.mxu0
    %v2473 = vadd.f32 %v2137, %v2472
    %2474 = vmatmul.bf16.gmra.mxu0 %v2084
    %v2475 = vpop.f32.mrf.mxu0
    %v2476 = vadd.f32 %v2137, %v2475
    %v2477 = vpop.f32.mrf.mxu0
    %v2478 = vadd.f32 %v2137, %v2477
    %2479 = vmatmul.bf16.gmra.mxu0 %v2086
    %v2480 = vpop.f32.mrf.mxu0
    %v2481 = vadd.f32 %v2137, %v2480
    %v2482 = vpop.f32.mrf.mxu0
    %v2483 = vadd.f32 %v2137, %v2482
    %2484 = vmatmul.bf16.gmra.mxu0 %v2088
    %v2485 = vpop.f32.mrf.mxu0
    %v2486 = vadd.f32 %v2137, %v2485
    %v2487 = vpop.f32.mrf.mxu0
    %v2488 = vadd.f32 %v2137, %v2487
    %2489 = vmatmul.bf16.gmra.mxu0 %v2090
    %v2490 = vpop.f32.mrf.mxu0
    %v2491 = vadd.f32 %v2137, %v2490
    %v2492 = vpop.f32.mrf.mxu0
    %v2493 = vadd.f32 %v2137, %v2492
    %2494 = vmatmul.bf16.gmra.mxu0 %v2092
    %v2495 = vpop.f32.mrf.mxu0
    %v2496 = vadd.f32 %v2137, %v2495
    %v2497 = vpop.f32.mrf.mxu0
    %v2498 = vadd.f32 %v2137, %v2497
    %2499 = vmatmul.bf16.gmra.mxu0 %v2094
    %v2500 = vpop.f32.mrf.mxu0
    %v2501 = vadd.f32 %v2137, %v2500
    %v2502 = vpop.f32.mrf.mxu0
    %v2503 = vadd.f32 %v2137, %v2502
    %2504 = vmatmul.bf16.gmra.mxu0 %v2096
    %v2505 = vpop.f32.mrf.mxu0
    %v2506 = vadd.f32 %v2137, %v2505
    %v2507 = vpop.f32.mrf.mxu0
    %v2508 = vadd.f32 %v2137, %v2507
    %2509 = vmatmul.bf16.gmra.mxu0 %v2098
    %v2510 = vpop.f32.mrf.mxu0
    %v2511 = vadd.f32 %v2137, %v2510
    %v2512 = vpop.f32.mrf.mxu0
    %v2513 = vadd.f32 %v2137, %v2512
    %2514 = vmatmul.bf16.gmra.mxu0 %v2100
    %v2515 = vpop.f32.mrf.mxu0
    %v2516 = vadd.f32 %v2137, %v2515
    %v2517 = vpop.f32.mrf.mxu0
    %2518 = vdwg.mxu0
    %2519 = vmatpush.bf16.msra.mxu0 %v2267
    %2520 = vmatpush.bf16.msra.mxu0 %v2265
    %2521 = vmatpush.bf16.msra.mxu0 %v2263
    %2522 = vmatpush.bf16.msra.mxu0 %v2261
    %2523 = vmatpush.bf16.msra.mxu0 %v2259
    %2524 = vmatpush.bf16.msra.mxu0 %v2257
    %2525 = vmatpush.bf16.msra.mxu0 %v2255
    %2526 = vmatpush.bf16.msra.mxu0 %v2253
    %2527 = vmatmul.bf16.gmra.mxu0 %v2077
    %v2528 = vpop.f32.mrf.mxu0
    %v2529 = vadd.f32 %v2456, %v2528
    %v2530 = vpop.f32.mrf.mxu0
    %v2531 = vadd.f32 %v2458, %v2530
    %2532 = vmatmul.bf16.gmra.mxu0 %v2079
    %v2533 = vpop.f32.mrf.mxu0
    %v2534 = vadd.f32 %v2461, %v2533
    %v2535 = vpop.f32.mrf.mxu0
    %v2536 = vadd.f32 %v2463, %v2535
    %2537 = vmatmul.bf16.gmra.mxu0 %v2081
    %v2538 = vpop.f32.mrf.mxu0
    %v2539 = vadd.f32 %v2466, %v2538
    %v2540 = vpop.f32.mrf.mxu0
    %v2541 = vadd.f32 %v2468, %v2540
    %2542 = vmatmul.bf16.gmra.mxu0 %v2083
    %v2543 = vpop.f32.mrf.mxu0
    %v2544 = vadd.f32 %v2471, %v2543
    %v2545 = vpop.f32.mrf.mxu0
    %v2546 = vadd.f32 %v2473, %v2545
    %2547 = vmatmul.bf16.gmra.mxu0 %v2085
    %v2548 = vpop.f32.mrf.mxu0
    %v2549 = vadd.f32 %v2476, %v2548
    %v2550 = vpop.f32.mrf.mxu0
    %v2551 = vadd.f32 %v2478, %v2550
    %2552 = vmatmul.bf16.gmra.mxu0 %v2087
    %v2553 = vpop.f32.mrf.mxu0
    %v2554 = vadd.f32 %v2481, %v2553
    %v2555 = vpop.f32.mrf.mxu0
    %v2556 = vadd.f32 %v2483, %v2555
    %2557 = vmatmul.bf16.gmra.mxu0 %v2089
    %v2558 = vpop.f32.mrf.mxu0
    %v2559 = vadd.f32 %v2486, %v2558
    %v2560 = vpop.f32.mrf.mxu0
    %v2561 = vadd.f32 %v2488, %v2560
    %2562 = vmatmul.bf16.gmra.mxu0 %v2091
    %v2563 = vpop.f32.mrf.mxu0
    %v2564 = vadd.f32 %v2491, %v2563
    %v2565 = vpop.f32.mrf.mxu0
    %v2566 = vadd.f32 %v2493, %v2565
    %2567 = vmatmul.bf16.gmra.mxu0 %v2093
    %v2568 = vpop.f32.mrf.mxu0
    %v2569 = vadd.f32 %v2496, %v2568
    %v2570 = vpop.f32.mrf.mxu0
    %v2571 = vadd.f32 %v2498, %v2570
    %2572 = vmatmul.bf16.gmra.mxu0 %v2095
    %v2573 = vpop.f32.mrf.mxu0
    %v2574 = vadd.f32 %v2501, %v2573
    %v2575 = vpop.f32.mrf.mxu0
    %v2576 = vadd.f32 %v2503, %v2575
    %2577 = vmatmul.bf16.gmra.mxu0 %v2097
    %v2578 = vpop.f32.mrf.mxu0
    %v2579 = vadd.f32 %v2506, %v2578
    %v2580 = vpop.f32.mrf.mxu0
    %v2581 = vadd.f32 %v2508, %v2580
    %2582 = vmatmul.bf16.gmra.mxu0 %v2099
    %v2583 = vpop.f32.mrf.mxu0
    %v2584 = vadd.f32 %v2511, %v2583
    %v2585 = vpop.f32.mrf.mxu0
    %v2586 = vadd.f32 %v2513, %v2585
    %2587 = vmatmul.bf16.gmra.mxu0 %v2101
    %v2588 = vpop.f32.mrf.mxu0
    %v2589 = vadd.f32 %v2516, %v2588
    %v2590 = vpop.f32.mrf.mxu0
    %2591 = vdwg.mxu0
    %v2592 = vmax.f32 %v2383, 0.0
    %v2593 = vmax.f32 %v2529, 0.0
    %v2594 = vmax.f32 %v2385, 0.0
    %v2595 = vmax.f32 %v2531, 0.0
    %v2596 = vmax.f32 %v2388, 0.0
    %v2597 = vmax.f32 %v2534, 0.0
    %v2598 = vmax.f32 %v2390, 0.0
    %v2599 = vmax.f32 %v2536, 0.0
    %v2600 = vmax.f32 %v2393, 0.0
    %v2601 = vmax.f32 %v2539, 0.0
    %v2602 = vmax.f32 %v2395, 0.0
    %v2603 = vmax.f32 %v2541, 0.0
    %v2604 = vmax.f32 %v2398, 0.0
    %v2605 = vmax.f32 %v2544, 0.0
    %v2606 = vmax.f32 %v2400, 0.0
    %v2607 = vmax.f32 %v2546, 0.0
    %v2608 = vmax.f32 %v2403, 0.0
    %v2609 = vmax.f32 %v2549, 0.0
    %v2610 = vmax.f32 %v2405, 0.0
    %v2611 = vmax.f32 %v2551, 0.0
    %v2612 = vmax.f32 %v2408, 0.0
    %v2613 = vmax.f32 %v2554, 0.0
    %v2614 = vmax.f32 %v2410, 0.0
    %v2615 = vmax.f32 %v2556, 0.0
    %v2616 = vmax.f32 %v2413, 0.0
    %v2617 = vmax.f32 %v2559, 0.0
    %v2618 = vmax.f32 %v2415, 0.0
    %v2619 = vmax.f32 %v2561, 0.0
    %v2620 = vmax.f32 %v2418, 0.0
    %v2621 = vmax.f32 %v2564, 0.0
    %v2622 = vmax.f32 %v2420, 0.0
    %v2623 = vmax.f32 %v2566, 0.0
    %v2624 = vmax.f32 %v2423, 0.0
    %v2625 = vmax.f32 %v2569, 0.0
    %v2626 = vmax.f32 %v2425, 0.0
    %v2627 = vmax.f32 %v2571, 0.0
    %v2628 = vmax.f32 %v2428, 0.0
    %v2629 = vmax.f32 %v2574, 0.0
    %v2630 = vmax.f32 %v2430, 0.0
    %v2631 = vmax.f32 %v2576, 0.0
    %v2632 = vmax.f32 %v2433, 0.0
    %v2633 = vmax.f32 %v2579, 0.0
    %v2634 = vmax.f32 %v2435, 0.0
    %v2635 = vmax.f32 %v2581, 0.0
    %v2636 = vmax.f32 %v2438, 0.0
    %v2637 = vmax.f32 %v2584, 0.0
    %v2638 = vmax.f32 %v2440, 0.0
    %v2639 = vmax.f32 %v2586, 0.0
    %v2640 = vmax.f32 %v2443, 0.0
    %v2641 = vmax.f32 %v2589, 0.0
    %v2642 = vpack.c.bf16 %v2594, %v2592
    %v2643 = vpack.c.bf16 %v2595, %v2593
    %v2644 = vpack.c.bf16 %v2598, %v2596
    %v2645 = vpack.c.bf16 %v2599, %v2597
    %v2646 = vpack.c.bf16 %v2602, %v2600
    %v2647 = vpack.c.bf16 %v2603, %v2601
    %v2648 = vpack.c.bf16 %v2606, %v2604
    %v2649 = vpack.c.bf16 %v2607, %v2605
    %v2650 = vpack.c.bf16 %v2610, %v2608
    %v2651 = vpack.c.bf16 %v2611, %v2609
    %v2652 = vpack.c.bf16 %v2614, %v2612
    %v2653 = vpack.c.bf16 %v2615, %v2613
    %v2654 = vpack.c.bf16 %v2618, %v2616
    %v2655 = vpack.c.bf16 %v2619, %v2617
    %v2656 = vpack.c.bf16 %v2622, %v2620
    %v2657 = vpack.c.bf16 %v2623, %v2621
    %v2658 = vpack.c.bf16 %v2626, %v2624
    %v2659 = vpack.c.bf16 %v2627, %v2625
    %v2660 = vpack.c.bf16 %v2630, %v2628
    %v2661 = vpack.c.bf16 %v2631, %v2629
    %v2662 = vpack.c.bf16 %v2634, %v2632
    %v2663 = vpack.c.bf16 %v2635, %v2633
    %v2664 = vpack.c.bf16 %v2638, %v2636
    %v2665 = vpack.c.bf16 %v2639, %v2637
    %v2666 = vpack.c.bf16 %v2640, %v2640
    %v2667 = vpack.c.bf16 %v2641, %v2641
    %v2668 = vld [vmem:[#allocation10] sm:$0xf]
    %v2669 = vld [vmem:[#allocation10 + $0x4] sm:$0xf]
    %v2670 = vld [vmem:[#allocation10 + $0x8] sm:$0xf]
    %v2671 = vld [vmem:[#allocation10 + $0xc] sm:$0xf]
    %v2672 = vld [vmem:[#allocation10 + $0x10] sm:$0xf]
    %v2673 = vld [vmem:[#allocation10 + $0x14] sm:$0xf]
    %v2674 = vld [vmem:[#allocation10 + $0x18] sm:$0xf]
    %v2675 = vld [vmem:[#allocation10 + $0x1c] sm:$0xf]
    %v2676 = vld [vmem:[#allocation10 + $0x20] sm:$0xf]
    %v2677 = vld [vmem:[#allocation10 + $0x24] sm:$0xf]
    %v2678 = vld [vmem:[#allocation10 + $0x28] sm:$0xf]
    %v2679 = vld [vmem:[#allocation10 + $0x2c] sm:$0xf]
    %v2680 = vld [vmem:[#allocation10 + $0x30] sm:$0xf]
    %v2681 = vld [vmem:[#allocation10 + $0x34] sm:$0xf]
    %v2682 = vld [vmem:[#allocation10 + $0x38] sm:$0xf]
    %v2683 = vld [vmem:[#allocation10 + $0x3c] sm:$0xf]
    %v2684 = vld [vmem:[#allocation10 + $0x40] sm:$0xf]
    %v2685 = vld [vmem:[#allocation10 + $0x44] sm:$0xf]
    %v2686 = vld [vmem:[#allocation10 + $0x48] sm:$0xf]
    %v2687 = vld [vmem:[#allocation10 + $0x4c] sm:$0xf]
    %v2688 = vld [vmem:[#allocation10 + $0x50] sm:$0xf]
    %v2689 = vld [vmem:[#allocation10 + $0x54] sm:$0xf]
    %v2690 = vld [vmem:[#allocation10 + $0x58] sm:$0xf]
    %v2691 = vld [vmem:[#allocation10 + $0x5c] sm:$0xf]
    %v2692 = vld [vmem:[#allocation10 + $0x60] sm:$0xf]
    %v2693 = vld [vmem:[#allocation10 + $0x64] sm:$0xf]
    %v2694 = vld [vmem:[#allocation10 + $0x68] sm:$0xf]
    %v2695 = vld [vmem:[#allocation10 + $0x6c] sm:$0xf]
    %v2696 = vld [vmem:[#allocation10 + $0x70] sm:$0xf]
    %v2697 = vld [vmem:[#allocation10 + $0x74] sm:$0xf]
    %v2698 = vld [vmem:[#allocation10 + $0x78] sm:$0xf]
    %v2699 = vld [vmem:[#allocation10 + $0x7c] sm:$0xf]
    %v2700 = vld [vmem:[%s6] sm:$0x1]
    %v2702 = vperm.slane %v2700, 0
    %v2736 = vunpack.c.l.b16 %v2668
    %v2737 = vunpack.c.l.b16 %v2669
    %v2738 = vunpack.c.l.b16 %v2670
    %v2739 = vunpack.c.l.b16 %v2671
    %v2740 = vunpack.c.l.b16 %v2672
    %v2741 = vunpack.c.l.b16 %v2673
    %v2742 = vunpack.c.l.b16 %v2674
    %v2743 = vunpack.c.l.b16 %v2675
    %v2744 = vunpack.c.l.b16 %v2676
    %v2745 = vunpack.c.l.b16 %v2677
    %v2746 = vunpack.c.l.b16 %v2678
    %v2747 = vunpack.c.l.b16 %v2679
    %v2748 = vunpack.c.l.b16 %v2680
    %v2749 = vunpack.c.l.b16 %v2681
    %v2750 = vunpack.c.l.b16 %v2682
    %v2751 = vunpack.c.l.b16 %v2683
    %v2752 = vunpack.c.l.b16 %v2684
    %v2753 = vunpack.c.l.b16 %v2685
    %v2754 = vunpack.c.l.b16 %v2686
    %v2755 = vunpack.c.l.b16 %v2687
    %v2756 = vunpack.c.l.b16 %v2688
    %v2757 = vunpack.c.l.b16 %v2689
    %v2758 = vunpack.c.l.b16 %v2690
    %v2759 = vunpack.c.l.b16 %v2691
    %v2760 = vunpack.c.l.b16 %v2692
    %v2761 = vunpack.c.l.b16 %v2693
    %v2762 = vunpack.c.l.b16 %v2694
    %v2763 = vunpack.c.l.b16 %v2695
    %v2764 = vunpack.c.l.b16 %v2696
    %v2765 = vunpack.c.l.b16 %v2697
    %v2766 = vunpack.c.l.b16 %v2698
    %v2767 = vunpack.c.l.b16 %v2699
    %v2768 = vpack.c.b16 %v2737, %v2736
    %v2769 = vpack.c.b16 %v2739, %v2738
    %v2770 = vpack.c.b16 %v2741, %v2740
    %v2771 = vpack.c.b16 %v2743, %v2742
    %v2772 = vpack.c.b16 %v2745, %v2744
    %v2773 = vpack.c.b16 %v2747, %v2746
    %v2774 = vpack.c.b16 %v2749, %v2748
    %v2775 = vpack.c.b16 %v2751, %v2750
    %v2776 = vpack.c.b16 %v2753, %v2752
    %v2777 = vpack.c.b16 %v2755, %v2754
    %v2778 = vpack.c.b16 %v2757, %v2756
    %v2779 = vpack.c.b16 %v2759, %v2758
    %v2780 = vpack.c.b16 %v2761, %v2760
    %v2781 = vpack.c.b16 %v2763, %v2762
    %v2782 = vpack.c.b16 %v2765, %v2764
    %v2783 = vpack.c.b16 %v2767, %v2766
    %2800 = vmatpush.bf16.msra.mxu0 %v2775
    %2801 = vmatpush.bf16.msra.mxu0 %v2774
    %2802 = vmatpush.bf16.msra.mxu0 %v2773
    %2803 = vmatpush.bf16.msra.mxu0 %v2772
    %2804 = vmatpush.bf16.msra.mxu0 %v2771
    %2805 = vmatpush.bf16.msra.mxu0 %v2770
    %2806 = vmatpush.bf16.msra.mxu0 %v2769
    %2807 = vmatpush.bf16.msra.mxu0 %v2768
    %2808 = vmatmul.bf16.gmra.mxu0 %v2642
    %v2809 = vpop.f32.mrf.mxu0
    %v2810 = vadd.f32 %v2702, %v2809
    %v2811 = vpop.f32.mrf.mxu0
    %v2812 = vadd.f32 %v2702, %v2811
    %2813 = vmatmul.bf16.gmra.mxu0 %v2644
    %v2814 = vpop.f32.mrf.mxu0
    %v2815 = vadd.f32 %v2702, %v2814
    %v2816 = vpop.f32.mrf.mxu0
    %v2817 = vadd.f32 %v2702, %v2816
    %2818 = vmatmul.bf16.gmra.mxu0 %v2646
    %v2819 = vpop.f32.mrf.mxu0
    %v2820 = vadd.f32 %v2702, %v2819
    %v2821 = vpop.f32.mrf.mxu0
    %v2822 = vadd.f32 %v2702, %v2821
    %2823 = vmatmul.bf16.gmra.mxu0 %v2648
    %v2824 = vpop.f32.mrf.mxu0
    %v2825 = vadd.f32 %v2702, %v2824
    %v2826 = vpop.f32.mrf.mxu0
    %v2827 = vadd.f32 %v2702, %v2826
    %2828 = vmatmul.bf16.gmra.mxu0 %v2650
    %v2829 = vpop.f32.mrf.mxu0
    %v2830 = vadd.f32 %v2702, %v2829
    %v2831 = vpop.f32.mrf.mxu0
    %v2832 = vadd.f32 %v2702, %v2831
    %2833 = vmatmul.bf16.gmra.mxu0 %v2652
    %v2834 = vpop.f32.mrf.mxu0
    %v2835 = vadd.f32 %v2702, %v2834
    %v2836 = vpop.f32.mrf.mxu0
    %v2837 = vadd.f32 %v2702, %v2836
    %2838 = vmatmul.bf16.gmra.mxu0 %v2654
    %v2839 = vpop.f32.mrf.mxu0
    %v2840 = vadd.f32 %v2702, %v2839
    %v2841 = vpop.f32.mrf.mxu0
    %v2842 = vadd.f32 %v2702, %v2841
    %2843 = vmatmul.bf16.gmra.mxu0 %v2656
    %v2844 = vpop.f32.mrf.mxu0
    %v2845 = vadd.f32 %v2702, %v2844
    %v2846 = vpop.f32.mrf.mxu0
    %v2847 = vadd.f32 %v2702, %v2846
    %2848 = vmatmul.bf16.gmra.mxu0 %v2658
    %v2849 = vpop.f32.mrf.mxu0
    %v2850 = vadd.f32 %v2702, %v2849
    %v2851 = vpop.f32.mrf.mxu0
    %v2852 = vadd.f32 %v2702, %v2851
    %2853 = vmatmul.bf16.gmra.mxu0 %v2660
    %v2854 = vpop.f32.mrf.mxu0
    %v2855 = vadd.f32 %v2702, %v2854
    %v2856 = vpop.f32.mrf.mxu0
    %v2857 = vadd.f32 %v2702, %v2856
    %2858 = vmatmul.bf16.gmra.mxu0 %v2662
    %v2859 = vpop.f32.mrf.mxu0
    %v2860 = vadd.f32 %v2702, %v2859
    %v2861 = vpop.f32.mrf.mxu0
    %v2862 = vadd.f32 %v2702, %v2861
    %2863 = vmatmul.bf16.gmra.mxu0 %v2664
    %v2864 = vpop.f32.mrf.mxu0
    %v2865 = vadd.f32 %v2702, %v2864
    %v2866 = vpop.f32.mrf.mxu0
    %v2867 = vadd.f32 %v2702, %v2866
    %2868 = vmatmul.bf16.gmra.mxu0 %v2666
    %v2869 = vpop.f32.mrf.mxu0
    %v2870 = vadd.f32 %v2702, %v2869
    %v2871 = vpop.f32.mrf.mxu0
    %2872 = vdwg.mxu0
    %2873 = vmatpush.bf16.msra.mxu0 %v2783
    %2874 = vmatpush.bf16.msra.mxu0 %v2782
    %2875 = vmatpush.bf16.msra.mxu0 %v2781
    %2876 = vmatpush.bf16.msra.mxu0 %v2780
    %2877 = vmatpush.bf16.msra.mxu0 %v2779
    %2878 = vmatpush.bf16.msra.mxu0 %v2778
    %2879 = vmatpush.bf16.msra.mxu0 %v2777
    %2880 = vmatpush.bf16.msra.mxu0 %v2776
    %2881 = vmatmul.bf16.gmra.mxu0 %v2643
    %v2882 = vpop.f32.mrf.mxu0
    %v2883 = vadd.f32 %v2810, %v2882
    %v2884 = vpop.f32.mrf.mxu0
    %v2885 = vadd.f32 %v2812, %v2884
    %2886 = vmatmul.bf16.gmra.mxu0 %v2645
    %v2887 = vpop.f32.mrf.mxu0
    %v2888 = vadd.f32 %v2815, %v2887
    %v2889 = vpop.f32.mrf.mxu0
    %v2890 = vadd.f32 %v2817, %v2889
    %2891 = vmatmul.bf16.gmra.mxu0 %v2647
    %v2892 = vpop.f32.mrf.mxu0
    %v2893 = vadd.f32 %v2820, %v2892
    %v2894 = vpop.f32.mrf.mxu0
    %v2895 = vadd.f32 %v2822, %v2894
    %2896 = vmatmul.bf16.gmra.mxu0 %v2649
    %v2897 = vpop.f32.mrf.mxu0
    %v2898 = vadd.f32 %v2825, %v2897
    %v2899 = vpop.f32.mrf.mxu0
    %v2900 = vadd.f32 %v2827, %v2899
    %2901 = vmatmul.bf16.gmra.mxu0 %v2651
    %v2902 = vpop.f32.mrf.mxu0
    %v2903 = vadd.f32 %v2830, %v2902
    %v2904 = vpop.f32.mrf.mxu0
    %v2905 = vadd.f32 %v2832, %v2904
    %2906 = vmatmul.bf16.gmra.mxu0 %v2653
    %v2907 = vpop.f32.mrf.mxu0
    %v2908 = vadd.f32 %v2835, %v2907
    %v2909 = vpop.f32.mrf.mxu0
    %v2910 = vadd.f32 %v2837, %v2909
    %2911 = vmatmul.bf16.gmra.mxu0 %v2655
    %v2912 = vpop.f32.mrf.mxu0
    %v2913 = vadd.f32 %v2840, %v2912
    %v2914 = vpop.f32.mrf.mxu0
    %v2915 = vadd.f32 %v2842, %v2914
    %2916 = vmatmul.bf16.gmra.mxu0 %v2657
    %v2917 = vpop.f32.mrf.mxu0
    %v2918 = vadd.f32 %v2845, %v2917
    %v2919 = vpop.f32.mrf.mxu0
    %v2920 = vadd.f32 %v2847, %v2919
    %2921 = vmatmul.bf16.gmra.mxu0 %v2659
    %v2922 = vpop.f32.mrf.mxu0
    %v2923 = vadd.f32 %v2850, %v2922
    %v2924 = vpop.f32.mrf.mxu0
    %v2925 = vadd.f32 %v2852, %v2924
    %2926 = vmatmul.bf16.gmra.mxu0 %v2661
    %v2927 = vpop.f32.mrf.mxu0
    %v2928 = vadd.f32 %v2855, %v2927
    %v2929 = vpop.f32.mrf.mxu0
    %v2930 = vadd.f32 %v2857, %v2929
    %2931 = vmatmul.bf16.gmra.mxu0 %v2663
    %v2932 = vpop.f32.mrf.mxu0
    %v2933 = vadd.f32 %v2860, %v2932
    %v2934 = vpop.f32.mrf.mxu0
    %v2935 = vadd.f32 %v2862, %v2934
    %2936 = vmatmul.bf16.gmra.mxu0 %v2665
    %v2937 = vpop.f32.mrf.mxu0
    %v2938 = vadd.f32 %v2865, %v2937
    %v2939 = vpop.f32.mrf.mxu0
    %v2940 = vadd.f32 %v2867, %v2939
    %2941 = vmatmul.bf16.gmra.mxu0 %v2667
    %v2942 = vpop.f32.mrf.mxu0
    %v2943 = vadd.f32 %v2870, %v2942
    %v2944 = vpop.f32.mrf.mxu0
    %2945 = vdwg.mxu0
    %2946 = vst [vmem:[#allocation11] sm:$0xff] %v2883
    %2947 = vst [vmem:[#allocation11 + $0x8] sm:$0xff] %v2885
    %2948 = vst [vmem:[#allocation11 + $0x10] sm:$0xff] %v2888
    %2949 = vst [vmem:[#allocation11 + $0x18] sm:$0xff] %v2890
    %2950 = vst [vmem:[#allocation11 + $0x20] sm:$0xff] %v2893
    %2951 = vst [vmem:[#allocation11 + $0x28] sm:$0xff] %v2895
    %2952 = vst [vmem:[#allocation11 + $0x30] sm:$0xff] %v2898
    %2953 = vst [vmem:[#allocation11 + $0x38] sm:$0xff] %v2900
    %2954 = vst [vmem:[#allocation11 + $0x40] sm:$0xff] %v2903
    %2955 = vst [vmem:[#allocation11 + $0x48] sm:$0xff] %v2905
    %2956 = vst [vmem:[#allocation11 + $0x50] sm:$0xff] %v2908
    %2957 = vst [vmem:[#allocation11 + $0x58] sm:$0xff] %v2910
    %2958 = vst [vmem:[#allocation11 + $0x60] sm:$0xff] %v2913
    %2959 = vst [vmem:[#allocation11 + $0x68] sm:$0xff] %v2915
    %2960 = vst [vmem:[#allocation11 + $0x70] sm:$0xff] %v2918
    %2961 = vst [vmem:[#allocation11 + $0x78] sm:$0xff] %v2920
    %2962 = vst [vmem:[#allocation11 + $0x80] sm:$0xff] %v2923
    %2963 = vst [vmem:[#allocation11 + $0x88] sm:$0xff] %v2925
    %2964 = vst [vmem:[#allocation11 + $0x90] sm:$0xff] %v2928
    %2965 = vst [vmem:[#allocation11 + $0x98] sm:$0xff] %v2930
    %2966 = vst [vmem:[#allocation11 + $0xa0] sm:$0xff] %v2933
    %2967 = vst [vmem:[#allocation11 + $0xa8] sm:$0xff] %v2935
    %2968 = vst [vmem:[#allocation11 + $0xb0] sm:$0xff] %v2938
    %2969 = vst [vmem:[#allocation11 + $0xb8] sm:$0xff] %v2940
    %2970 = vst [vmem:[#allocation11 + $0xc0] sm:$0xff] %v2943
    // Predicated region
    $region50: #{tpu_custom_call.1} parent=1 // pred_check
      _
    $region51: #{tpu_custom_call.1} parent=1 // pred_check_branch
      %2972 = sbr.rel (0) target = $region53
    $region52: #{tpu_custom_call.1} parent=1 // pred_region
      %2974 = vsyncadd [#allocation4], 0
      %s2975 = sshll.u32 [#allocation11], 4
      %s2976 = int_to_ptr.vmem [resolvable:$true] %s2975
      %s2977 = sshll.u32 %s7, 4
      %s2978 = int_to_ptr.hbm [resolvable:$true] %s2977
      %2983 = dma.vmem_to_hbm [thread:$0]  %s2976, 3200, %s2978, [#allocation4], 128, 128, 8
    $region53: #{tpu_custom_call.1} parent=1 // pred_fallthru
      _
    // Predicated region
    $region54: #{tpu_custom_call.1} parent=1 // pred_check
      _
    $region55: #{tpu_custom_call.1} parent=1 // pred_check_branch
      %2985 = sbr.rel (0) target = $region57
    $region56: #{tpu_custom_call.1} parent=1 // pred_region
      %2987 = dma.done [#allocation4], 3200
    $region57: #{tpu_custom_call.1} parent=1 // pred_fallthru
      _
    %2988 = vsyncpa [#allocation3], 1
    %2989 = vsyncpa [#allocation6], 1
    %2990 = vsyncpa [#allocation9], 1
    %2991 = vsyncpa [#allocation4], 1

</llo_original>
